<compile_context>
chip_gen: v6e
topology: v6e:2x2x1
jax: 0.10.0
libtpu: 0.0.40
codegen_flags: <defaults>
</compile_context>

<pallas_src>
import jax
import jax.numpy as jnp
from jax import lax
from jax.experimental import pallas as pl
from jax.experimental.pallas import tpu as pltpu


LN_EPS = 1e-5
NUM_LAYERS = 3  # 2 encoder layers + 1 decoder layer


def _layer_norm(y, gain, inv_d):
    """LayerNorm (weight only, eps=1e-5) with two independent reductions."""
    s1 = jnp.sum(y, axis=-1, keepdims=True)
    s2 = jnp.sum(y * y, axis=-1, keepdims=True)
    mu = s1 * inv_d
    var = s2 * inv_d - mu * mu
    return (y - mu) * lax.rsqrt(var + LN_EPS) * gain


def fused_predictive_block_kernel(x_ref, wqkv_ref, wo_ref, w1_ref, w2_ref,
                                  g_ref, out_ref):
    """All three post-norm TransformerEncoderLayers for one timestep.

    x_ref   : (1, S, D)      current timestep's input
    wqkv_ref: (L, 3, D, D)   Q/K/V weights, pre-transposed, 1/sqrt(D) folded
                             into Q (bf16)
    wo_ref  : (L, D, D)      attention output projection, pre-transposed (bf16)
    w1_ref  : (L, D, D)      FFN linear1, pre-transposed (bf16)
    w2_ref  : (L, D, D)      FFN linear2, pre-transposed (bf16)
    g_ref   : (2L, D)        LayerNorm gains; row 2l = norm1, row 2l+1 = norm2
    out_ref : (1, 2, S, D)   [z_t, next-step prediction]
    """
    x = x_ref[0].astype(jnp.float32)                        # (S, D)
    d = x.shape[-1]
    inv_d = jnp.float32(1.0 / d)
    g_all = g_ref[...].astype(jnp.float32)                  # (2L, D)

    def layer(h, li):
        hb = h.astype(jnp.bfloat16)
        # ---- single-head self-attention: three lane-aligned dots ----
        q = jnp.dot(hb, wqkv_ref[li, 0], preferred_element_type=jnp.float32)
        k = jnp.dot(hb, wqkv_ref[li, 1], preferred_element_type=jnp.float32)
        v = jnp.dot(hb, wqkv_ref[li, 2], preferred_element_type=jnp.float32)

        # q @ k^T without materializing a transpose of k (f32 accumulation).
        s = lax.dot_general(q.astype(jnp.bfloat16), k.astype(jnp.bfloat16),
                            (((1,), (1,)), ((), ())),
                            preferred_element_type=jnp.float32)      # (S, S)
        s = s - jnp.max(s, axis=-1, keepdims=True)
        p = jnp.exp(s)
        p = p * pl.reciprocal(jnp.sum(p, axis=-1, keepdims=True), approx=True)

        attn = jnp.dot(p.astype(jnp.bfloat16), v.astype(jnp.bfloat16),
                       preferred_element_type=jnp.float32)           # (S, D)
        attn = jnp.dot(attn.astype(jnp.bfloat16), wo_ref[li],
                       preferred_element_type=jnp.float32)

        # ---- residual + LayerNorm1 (no bias) ----
        y = _layer_norm(h + attn, g_all[2 * li:2 * li + 1, :], inv_d)

        # ---- feed-forward: linear1 -> relu -> linear2 (bias=False) ----
        yb = y.astype(jnp.bfloat16)
        ff = jnp.maximum(
            jnp.dot(yb, w1_ref[li], preferred_element_type=jnp.float32), 0.0)
        ff = jnp.dot(ff.astype(jnp.bfloat16), w2_ref[li],
                     preferred_element_type=jnp.float32)

        # ---- residual + LayerNorm2 (no bias) ----
        return _layer_norm(y + ff, g_all[2 * li + 1:2 * li + 2, :], inv_d)

    h = layer(x, 0)        # encoder layer 0
    z = layer(h, 1)        # encoder layer 1  -> latent z_t
    pred = layer(z, 2)     # decoder layer    -> internal next-step prediction

    out_ref[0, 0, :, :] = z.astype(out_ref.dtype)
    out_ref[0, 1, :, :] = pred.astype(out_ref.dtype)


def predictive_block_forward(params, x_steps):
    """Runs T independent timesteps in ONE pallas_call.

    x_steps: (T, S, D) -> returns (z_all, pred_all), each (T, S, D).
    """
    T, S, D = x_steps.shape

    def full_spec(shape):
        return pl.BlockSpec(shape, lambda t, _s=len(shape): (0,) * _s)

    # Advisory cost estimate (tiny flops, ~tens of KiB of bytes).
    flops = T * NUM_LAYERS * (12 * S * D * D + 4 * S * S * D)
    transcendentals = T * NUM_LAYERS * (S * S + 2 * S)
    bytes_w = 2 * (params["wqkv_t"].size + params["wo_t"].size +
                   params["w1_t"].size + params["w2_t"].size) + 4 * params["g"].size
    bytes_io = 4 * x_steps.size + 4 * T * 2 * S * D
    cost = pl.CostEstimate(flops=flops, transcendentals=transcendentals,
                           bytes_accessed=bytes_w + bytes_io)

    out = pl.pallas_call(
        fused_predictive_block_kernel,
        grid=(T,),
        in_specs=[
            pl.BlockSpec((1, S, D), lambda t: (t, 0, 0)),
            full_spec(params["wqkv_t"].shape),   # constant index_map: weights
            full_spec(params["wo_t"].shape),     # are DMA'd once, not per step
            full_spec(params["w1_t"].shape),
            full_spec(params["w2_t"].shape),
            full_spec(params["g"].shape),
        ],
        out_specs=pl.BlockSpec((1, 2, S, D), lambda t: (t, 0, 0, 0)),
        out_shape=jax.ShapeDtypeStruct((T, 2, S, D), x_steps.dtype),
        compiler_params=pltpu.CompilerParams(
            dimension_semantics=("parallel",)),   # shards timesteps on v7x TCs
        cost_estimate=cost,
    )(x_steps, params["wqkv_t"], params["wo_t"], params["w1_t"],
      params["w2_t"], params["g"])

    return out[:, 0], out[:, 1]


_forward_jit = jax.jit(predictive_block_forward)


def _init_one_layer(key, d_model):
    """Deterministic init matching PyTorch defaults (bias=False)."""
    k_inproj, k_out, k_l1, k_l2 = jax.random.split(key, 4)
    # nn.MultiheadAttention in_proj_weight: xavier_uniform over (3D, D)
    limit_in = (6.0 / (3 * d_model + d_model)) ** 0.5
    in_proj = jax.random.uniform(k_inproj, (3 * d_model, d_model),
                                 jnp.float32, -limit_in, limit_in)
    wq = in_proj[:d_model]
    wk = in_proj[d_model:2 * d_model]
    wv = in_proj[2 * d_model:]
    # Linear layers: kaiming-uniform-ish bound 1/sqrt(fan_in)
    limit = (1.0 / d_model) ** 0.5
    wo = jax.random.uniform(k_out, (d_model, d_model), jnp.float32, -limit, limit)
    w1 = jax.random.uniform(k_l1, (d_model, d_model), jnp.float32, -limit, limit)
    w2 = jax.random.uniform(k_l2, (d_model, d_model), jnp.float32, -limit, limit)

    scale = 1.0 / (float(d_model) ** 0.5)     # nhead=1 -> head_dim == d_model
    # Pre-transpose so the kernel computes x @ W (PyTorch Linear does x @ W.T);
    # fold the attention scale into Q; keep Q/K/V as separate lane-aligned mats.
    wqkv = jnp.stack([wq.T * scale, wk.T, wv.T], axis=0)   # (3, D, D)
    return wqkv, wo.T, w1.T, w2.T


def init_params(key, d_model):
    """Stacked parameters for [encoder0, encoder1, decoder] (weights in bf16).

    nn.TransformerEncoder deep-copies its layer, so both encoder layers start
    with identical weights; the decoder layer is initialized separately.
    """
    k_enc, k_dec = jax.random.split(key, 2)
    layer_keys = [k_enc, k_enc, k_dec]        # encoder layers share init
    wqkv_t, wo_t, w1_t, w2_t = [], [], [], []
    for k in layer_keys:
        a, b, c, d_ = _init_one_layer(k, d_model)
        wqkv_t.append(a)
        wo_t.append(b)
        w1_t.append(c)
        w2_t.append(d_)
    return {
        "wqkv_t": jnp.stack(wqkv_t).astype(jnp.bfloat16),   # (L, 3, D, D)
        "wo_t": jnp.stack(wo_t).astype(jnp.bfloat16),        # (L, D, D)
        "w1_t": jnp.stack(w1_t).astype(jnp.bfloat16),        # (L, D, D)
        "w2_t": jnp.stack(w2_t).astype(jnp.bfloat16),        # (L, D, D)
        "g": jnp.ones((2 * NUM_LAYERS, d_model), jnp.float32),  # LN gains
    }


class OnlinePredictiveBlockPallas:
    """JAX/Pallas port of OnlinePredictiveBlock's forward pass.

    forward(x_t):
      1) (online training step skipped -- see TODO at top of file)
      2) z_t = encoder(x_t)         # 2 TransformerEncoderLayers
      3) last_pred = decoder(z_t)   # 1 TransformerEncoderLayer (stored)
      4) return z_t
    All three layers run inside ONE fused Pallas kernel; forward_window()
    amortizes kernel launch over a window of independent timesteps.
    """

    def __init__(self, input_dim, token_depth, seed=0):
        assert input_dim == token_depth, (
            "d_model of the transformer layers is token_depth; the 2-D input's "
            "feature dim must match it (as in the PyTorch module).")
        self.token_depth = token_depth
        self.params = init_params(jax.random.PRNGKey(seed), token_depth)
        self.last_pred = None
        self.last_latent = None

    def forward(self, x_t):
        # TODO(synk): MSE(last_pred, x_t) backward + Adam step is skipped
        # (no forward-only Pallas equivalent); last_pred is still tracked so
        # the stateful interface matches the PyTorch module.
        z, pred = _forward_jit(self.params, x_t[None])   # T=1 path
        self.last_latent = z[0]
        self.last_pred = pred[0]
        return self.last_latent

    def forward_window(self, x_window):
        """Amortized path: x_window is (T, batch, D); one pallas_call for all
        T timesteps (valid because the online weight update is frozen)."""
        z, pred = _forward_jit(self.params, x_window)
        self.last_latent = z[-1]
        self.last_pred = pred[-1]
        return z


if __name__ == "__main__":
    # x_t: [batch_size, input_dim]; the batch axis acts as the sequence axis
    # for self-attention, input_dim == token_depth (d_model).
    batch_size = 8
    token_depth = 32
    window = 8

    key = jax.random.PRNGKey(0)
    k0, k1, k2 = jax.random.split(key, 3)
    x_t = jax.random.normal(k0, (batch_size, token_depth), jnp.float32)
    x_t1 = jax.random.normal(k1, (batch_size, token_depth), jnp.float32)
    x_win = jax.random.normal(k2, (window, batch_size, token_depth), jnp.float32)

    block = OnlinePredictiveBlockPallas(input_dim=token_depth,
                                        token_depth=token_depth, seed=0)

    z0 = block.forward(x_t)             # first call: no stored prediction yet
    z1 = block.forward(x_t1)            # second call: exercises last_pred path
    z_win = block.forward_window(x_win)  # amortized multi-timestep path
    jax.block_until_ready((z0, z1, z_win))

    assert z0.shape == (batch_size, token_depth)
    assert z1.shape == (batch_size, token_depth)
    assert z_win.shape == (window, batch_size, token_depth)
    assert block.last_pred.shape == (batch_size, token_depth)
    assert bool(jnp.all(jnp.isfinite(z0)))
    assert bool(jnp.all(jnp.isfinite(z1)))
    assert bool(jnp.all(jnp.isfinite(z_win)))
    assert bool(jnp.all(jnp.isfinite(block.last_pred)))

    print("KERNEL_OK")
</pallas_src>

<mosaic_0001>
module attributes {stable_mosaic.version = 11 : i64} {
  func.func @fused_predictive_block_kernel(%arg0: i32, %arg1: memref<1x8x32xf32, #tpu.memory_space<vmem>>, %arg2: memref<3x3x32x32xbf16, #tpu.memory_space<vmem>>, %arg3: memref<3x32x32xbf16, #tpu.memory_space<vmem>>, %arg4: memref<3x32x32xbf16, #tpu.memory_space<vmem>>, %arg5: memref<3x32x32xbf16, #tpu.memory_space<vmem>>, %arg6: memref<6x32xf32, #tpu.memory_space<vmem>>, %arg7: memref<1x2x8x32xf32, #tpu.memory_space<vmem>>) attributes {dimension_semantics = [#tpu.dimension_semantics<parallel>], iteration_bounds = array<i64: 1>, scalar_prefetch = 0 : i64, scratch_operands = 0 : i64, tpu.core_type = #tpu.core_type<tc>, window_params = [{transform_indices = @transform_0, window_bounds = array<i64: 1, 8, 32>}, {pipeline_mode = #tpu.pipeline_mode<synchronous>, transform_indices = @transform_1, window_bounds = array<i64: 3, 3, 32, 32>}, {pipeline_mode = #tpu.pipeline_mode<synchronous>, transform_indices = @transform_2, window_bounds = array<i64: 3, 32, 32>}, {pipeline_mode = #tpu.pipeline_mode<synchronous>, transform_indices = @transform_3, window_bounds = array<i64: 3, 32, 32>}, {pipeline_mode = #tpu.pipeline_mode<synchronous>, transform_indices = @transform_4, window_bounds = array<i64: 3, 32, 32>}, {pipeline_mode = #tpu.pipeline_mode<synchronous>, transform_indices = @transform_5, window_bounds = array<i64: 6, 32>}, {transform_indices = @transform_6, window_bounds = array<i64: 1, 2, 8, 32>}]} {
    %c0 = arith.constant 0 : index
    %c0_0 = arith.constant 0 : index
    %c0_1 = arith.constant 0 : index
    %0 = vector.load %arg1[%c0, %c0_0, %c0_1] : memref<1x8x32xf32, #tpu.memory_space<vmem>>, vector<1x8x32xf32>
    %1 = vector.shape_cast %0 : vector<1x8x32xf32> to vector<8x32xf32>
    %c0_2 = arith.constant 0 : index
    %c0_3 = arith.constant 0 : index
    %2 = vector.load %arg6[%c0_2, %c0_3] : memref<6x32xf32, #tpu.memory_space<vmem>>, vector<6x32xf32>
    %3 = arith.truncf %1 : vector<8x32xf32> to vector<8x32xbf16>
    %c0_4 = arith.constant 0 : index
    %c0_5 = arith.constant 0 : index
    %c0_6 = arith.constant 0 : index
    %c0_7 = arith.constant 0 : index
    %4 = vector.load %arg2[%c0_4, %c0_5, %c0_6, %c0_7] : memref<3x3x32x32xbf16, #tpu.memory_space<vmem>>, vector<1x1x32x32xbf16>
    %5 = vector.shape_cast %4 : vector<1x1x32x32xbf16> to vector<32x32xbf16>
    %cst = arith.constant dense<0.000000e+00> : vector<8x32xf32>
    %6 = tpu.matmul %3, %5, %cst {dimension_numbers = #tpu.dot_dimension_numbers<[1], [0], [0], [1], [0, 0, 1, 1], [], []>} : vector<8x32xbf16>, vector<32x32xbf16>, vector<8x32xf32> -> vector<8x32xf32>
    %c0_8 = arith.constant 0 : index
    %c1 = arith.constant 1 : index
    %c0_9 = arith.constant 0 : index
    %c0_10 = arith.constant 0 : index
    %7 = vector.load %arg2[%c0_8, %c1, %c0_9, %c0_10] : memref<3x3x32x32xbf16, #tpu.memory_space<vmem>>, vector<1x1x32x32xbf16>
    %8 = vector.shape_cast %7 : vector<1x1x32x32xbf16> to vector<32x32xbf16>
    %cst_11 = arith.constant dense<0.000000e+00> : vector<8x32xf32>
    %9 = tpu.matmul %3, %8, %cst_11 {dimension_numbers = #tpu.dot_dimension_numbers<[1], [0], [0], [1], [0, 0, 1, 1], [], []>} : vector<8x32xbf16>, vector<32x32xbf16>, vector<8x32xf32> -> vector<8x32xf32>
    %c0_12 = arith.constant 0 : index
    %c2 = arith.constant 2 : index
    %c0_13 = arith.constant 0 : index
    %c0_14 = arith.constant 0 : index
    %10 = vector.load %arg2[%c0_12, %c2, %c0_13, %c0_14] : memref<3x3x32x32xbf16, #tpu.memory_space<vmem>>, vector<1x1x32x32xbf16>
    %11 = vector.shape_cast %10 : vector<1x1x32x32xbf16> to vector<32x32xbf16>
    %cst_15 = arith.constant dense<0.000000e+00> : vector<8x32xf32>
    %12 = tpu.matmul %3, %11, %cst_15 {dimension_numbers = #tpu.dot_dimension_numbers<[1], [0], [0], [1], [0, 0, 1, 1], [], []>} : vector<8x32xbf16>, vector<32x32xbf16>, vector<8x32xf32> -> vector<8x32xf32>
    %13 = arith.truncf %6 : vector<8x32xf32> to vector<8x32xbf16>
    %14 = arith.truncf %9 : vector<8x32xf32> to vector<8x32xbf16>
    %cst_16 = arith.constant dense<0.000000e+00> : vector<8x8xf32>
    %15 = tpu.matmul %13, %14, %cst_16 {dimension_numbers = #tpu.dot_dimension_numbers<[1], [1], [0], [0], [0, 0, 1, 0], [], []>} : vector<8x32xbf16>, vector<8x32xbf16>, vector<8x8xf32> -> vector<8x8xf32>
    %cst_17 = arith.constant dense<0xFF800000> : vector<8xf32>
    %16 = vector.multi_reduction <maximumf>, %15, %cst_17 [1] : vector<8x8xf32> to vector<8xf32>
    %17 = vector.shape_cast %16 : vector<8xf32> to vector<8x1xf32>
    %18 = vector.broadcast %17 : vector<8x1xf32> to vector<8x8xf32>
    %19 = arith.subf %15, %18 : vector<8x8xf32>
    %20 = math.exp %19 : vector<8x8xf32>
    %cst_18 = arith.constant dense<0.000000e+00> : vector<8xf32>
    %21 = vector.multi_reduction <add>, %20, %cst_18 [1] : vector<8x8xf32> to vector<8xf32>
    %22 = vector.shape_cast %21 : vector<8xf32> to vector<8x1xf32>
    %23 = tpu.reciprocal %22 {approx = true} : vector<8x1xf32> -> vector<8x1xf32>
    %24 = vector.broadcast %23 : vector<8x1xf32> to vector<8x8xf32>
    %25 = arith.mulf %20, %24 : vector<8x8xf32>
    %26 = arith.truncf %25 : vector<8x8xf32> to vector<8x8xbf16>
    %27 = arith.truncf %12 : vector<8x32xf32> to vector<8x32xbf16>
    %cst_19 = arith.constant dense<0.000000e+00> : vector<8x32xf32>
    %28 = tpu.matmul %26, %27, %cst_19 {dimension_numbers = #tpu.dot_dimension_numbers<[1], [0], [0], [1], [0, 0, 1, 1], [], []>} : vector<8x8xbf16>, vector<8x32xbf16>, vector<8x32xf32> -> vector<8x32xf32>
    %29 = arith.truncf %28 : vector<8x32xf32> to vector<8x32xbf16>
    %c0_20 = arith.constant 0 : index
    %c0_21 = arith.constant 0 : index
    %c0_22 = arith.constant 0 : index
    %30 = vector.load %arg3[%c0_20, %c0_21, %c0_22] : memref<3x32x32xbf16, #tpu.memory_space<vmem>>, vector<1x32x32xbf16>
    %31 = vector.shape_cast %30 : vector<1x32x32xbf16> to vector<32x32xbf16>
    %cst_23 = arith.constant dense<0.000000e+00> : vector<8x32xf32>
    %32 = tpu.matmul %29, %31, %cst_23 {dimension_numbers = #tpu.dot_dimension_numbers<[1], [0], [0], [1], [0, 0, 1, 1], [], []>} : vector<8x32xbf16>, vector<32x32xbf16>, vector<8x32xf32> -> vector<8x32xf32>
    %33 = arith.addf %1, %32 : vector<8x32xf32>
    %34 = vector.extract_strided_slice %2 {offsets = [0, 0], sizes = [1, 32], strides = [1, 1]} : vector<6x32xf32> to vector<1x32xf32>
    %cst_24 = arith.constant dense<0.000000e+00> : vector<8xf32>
    %35 = vector.multi_reduction <add>, %33, %cst_24 [1] : vector<8x32xf32> to vector<8xf32>
    %36 = vector.shape_cast %35 : vector<8xf32> to vector<8x1xf32>
    %37 = arith.mulf %33, %33 : vector<8x32xf32>
    %cst_25 = arith.constant dense<0.000000e+00> : vector<8xf32>
    %38 = vector.multi_reduction <add>, %37, %cst_25 [1] : vector<8x32xf32> to vector<8xf32>
    %39 = vector.shape_cast %38 : vector<8xf32> to vector<8x1xf32>
    %cst_26 = arith.constant 3.125000e-02 : f32
    %40 = vector.broadcast %cst_26 : f32 to vector<8x1xf32>
    %41 = arith.mulf %36, %40 : vector<8x1xf32>
    %cst_27 = arith.constant 3.125000e-02 : f32
    %42 = vector.broadcast %cst_27 : f32 to vector<8x1xf32>
    %43 = arith.mulf %39, %42 : vector<8x1xf32>
    %44 = arith.mulf %41, %41 : vector<8x1xf32>
    %45 = arith.subf %43, %44 : vector<8x1xf32>
    %46 = vector.broadcast %41 : vector<8x1xf32> to vector<8x32xf32>
    %47 = arith.subf %33, %46 : vector<8x32xf32>
    %cst_28 = arith.constant 9.99999974E-6 : f32
    %48 = vector.broadcast %cst_28 : f32 to vector<8x1xf32>
    %49 = arith.addf %45, %48 : vector<8x1xf32>
    %50 = math.rsqrt %49 : vector<8x1xf32>
    %51 = vector.broadcast %50 : vector<8x1xf32> to vector<8x32xf32>
    %52 = arith.mulf %47, %51 : vector<8x32xf32>
    %53 = vector.broadcast %34 : vector<1x32xf32> to vector<8x32xf32>
    %54 = arith.mulf %52, %53 : vector<8x32xf32>
    %55 = arith.truncf %54 : vector<8x32xf32> to vector<8x32xbf16>
    %c0_29 = arith.constant 0 : index
    %c0_30 = arith.constant 0 : index
    %c0_31 = arith.constant 0 : index
    %56 = vector.load %arg4[%c0_29, %c0_30, %c0_31] : memref<3x32x32xbf16, #tpu.memory_space<vmem>>, vector<1x32x32xbf16>
    %57 = vector.shape_cast %56 : vector<1x32x32xbf16> to vector<32x32xbf16>
    %cst_32 = arith.constant dense<0.000000e+00> : vector<8x32xf32>
    %58 = tpu.matmul %55, %57, %cst_32 {dimension_numbers = #tpu.dot_dimension_numbers<[1], [0], [0], [1], [0, 0, 1, 1], [], []>} : vector<8x32xbf16>, vector<32x32xbf16>, vector<8x32xf32> -> vector<8x32xf32>
    %cst_33 = arith.constant 0.000000e+00 : f32
    %59 = vector.broadcast %cst_33 : f32 to vector<8x32xf32>
    %60 = arith.maximumf %58, %59 : vector<8x32xf32>
    %61 = arith.truncf %60 : vector<8x32xf32> to vector<8x32xbf16>
    %c0_34 = arith.constant 0 : index
    %c0_35 = arith.constant 0 : index
    %c0_36 = arith.constant 0 : index
    %62 = vector.load %arg5[%c0_34, %c0_35, %c0_36] : memref<3x32x32xbf16, #tpu.memory_space<vmem>>, vector<1x32x32xbf16>
    %63 = vector.shape_cast %62 : vector<1x32x32xbf16> to vector<32x32xbf16>
    %cst_37 = arith.constant dense<0.000000e+00> : vector<8x32xf32>
    %64 = tpu.matmul %61, %63, %cst_37 {dimension_numbers = #tpu.dot_dimension_numbers<[1], [0], [0], [1], [0, 0, 1, 1], [], []>} : vector<8x32xbf16>, vector<32x32xbf16>, vector<8x32xf32> -> vector<8x32xf32>
    %65 = arith.addf %54, %64 : vector<8x32xf32>
    %66 = vector.extract_strided_slice %2 {offsets = [1, 0], sizes = [1, 32], strides = [1, 1]} : vector<6x32xf32> to vector<1x32xf32>
    %cst_38 = arith.constant dense<0.000000e+00> : vector<8xf32>
    %67 = vector.multi_reduction <add>, %65, %cst_38 [1] : vector<8x32xf32> to vector<8xf32>
    %68 = vector.shape_cast %67 : vector<8xf32> to vector<8x1xf32>
    %69 = arith.mulf %65, %65 : vector<8x32xf32>
    %cst_39 = arith.constant dense<0.000000e+00> : vector<8xf32>
    %70 = vector.multi_reduction <add>, %69, %cst_39 [1] : vector<8x32xf32> to vector<8xf32>
    %71 = vector.shape_cast %70 : vector<8xf32> to vector<8x1xf32>
    %cst_40 = arith.constant 3.125000e-02 : f32
    %72 = vector.broadcast %cst_40 : f32 to vector<8x1xf32>
    %73 = arith.mulf %68, %72 : vector<8x1xf32>
    %cst_41 = arith.constant 3.125000e-02 : f32
    %74 = vector.broadcast %cst_41 : f32 to vector<8x1xf32>
    %75 = arith.mulf %71, %74 : vector<8x1xf32>
    %76 = arith.mulf %73, %73 : vector<8x1xf32>
    %77 = arith.subf %75, %76 : vector<8x1xf32>
    %78 = vector.broadcast %73 : vector<8x1xf32> to vector<8x32xf32>
    %79 = arith.subf %65, %78 : vector<8x32xf32>
    %cst_42 = arith.constant 9.99999974E-6 : f32
    %80 = vector.broadcast %cst_42 : f32 to vector<8x1xf32>
    %81 = arith.addf %77, %80 : vector<8x1xf32>
    %82 = math.rsqrt %81 : vector<8x1xf32>
    %83 = vector.broadcast %82 : vector<8x1xf32> to vector<8x32xf32>
    %84 = arith.mulf %79, %83 : vector<8x32xf32>
    %85 = vector.broadcast %66 : vector<1x32xf32> to vector<8x32xf32>
    %86 = arith.mulf %84, %85 : vector<8x32xf32>
    %87 = arith.truncf %86 : vector<8x32xf32> to vector<8x32xbf16>
    %c1_43 = arith.constant 1 : index
    %c0_44 = arith.constant 0 : index
    %c0_45 = arith.constant 0 : index
    %c0_46 = arith.constant 0 : index
    %88 = vector.load %arg2[%c1_43, %c0_44, %c0_45, %c0_46] : memref<3x3x32x32xbf16, #tpu.memory_space<vmem>>, vector<1x1x32x32xbf16>
    %89 = vector.shape_cast %88 : vector<1x1x32x32xbf16> to vector<32x32xbf16>
    %cst_47 = arith.constant dense<0.000000e+00> : vector<8x32xf32>
    %90 = tpu.matmul %87, %89, %cst_47 {dimension_numbers = #tpu.dot_dimension_numbers<[1], [0], [0], [1], [0, 0, 1, 1], [], []>} : vector<8x32xbf16>, vector<32x32xbf16>, vector<8x32xf32> -> vector<8x32xf32>
    %c1_48 = arith.constant 1 : index
    %c1_49 = arith.constant 1 : index
    %c0_50 = arith.constant 0 : index
    %c0_51 = arith.constant 0 : index
    %91 = vector.load %arg2[%c1_48, %c1_49, %c0_50, %c0_51] : memref<3x3x32x32xbf16, #tpu.memory_space<vmem>>, vector<1x1x32x32xbf16>
    %92 = vector.shape_cast %91 : vector<1x1x32x32xbf16> to vector<32x32xbf16>
    %cst_52 = arith.constant dense<0.000000e+00> : vector<8x32xf32>
    %93 = tpu.matmul %87, %92, %cst_52 {dimension_numbers = #tpu.dot_dimension_numbers<[1], [0], [0], [1], [0, 0, 1, 1], [], []>} : vector<8x32xbf16>, vector<32x32xbf16>, vector<8x32xf32> -> vector<8x32xf32>
    %c1_53 = arith.constant 1 : index
    %c2_54 = arith.constant 2 : index
    %c0_55 = arith.constant 0 : index
    %c0_56 = arith.constant 0 : index
    %94 = vector.load %arg2[%c1_53, %c2_54, %c0_55, %c0_56] : memref<3x3x32x32xbf16, #tpu.memory_space<vmem>>, vector<1x1x32x32xbf16>
    %95 = vector.shape_cast %94 : vector<1x1x32x32xbf16> to vector<32x32xbf16>
    %cst_57 = arith.constant dense<0.000000e+00> : vector<8x32xf32>
    %96 = tpu.matmul %87, %95, %cst_57 {dimension_numbers = #tpu.dot_dimension_numbers<[1], [0], [0], [1], [0, 0, 1, 1], [], []>} : vector<8x32xbf16>, vector<32x32xbf16>, vector<8x32xf32> -> vector<8x32xf32>
    %97 = arith.truncf %90 : vector<8x32xf32> to vector<8x32xbf16>
    %98 = arith.truncf %93 : vector<8x32xf32> to vector<8x32xbf16>
    %cst_58 = arith.constant dense<0.000000e+00> : vector<8x8xf32>
    %99 = tpu.matmul %97, %98, %cst_58 {dimension_numbers = #tpu.dot_dimension_numbers<[1], [1], [0], [0], [0, 0, 1, 0], [], []>} : vector<8x32xbf16>, vector<8x32xbf16>, vector<8x8xf32> -> vector<8x8xf32>
    %cst_59 = arith.constant dense<0xFF800000> : vector<8xf32>
    %100 = vector.multi_reduction <maximumf>, %99, %cst_59 [1] : vector<8x8xf32> to vector<8xf32>
    %101 = vector.shape_cast %100 : vector<8xf32> to vector<8x1xf32>
    %102 = vector.broadcast %101 : vector<8x1xf32> to vector<8x8xf32>
    %103 = arith.subf %99, %102 : vector<8x8xf32>
    %104 = math.exp %103 : vector<8x8xf32>
    %cst_60 = arith.constant dense<0.000000e+00> : vector<8xf32>
    %105 = vector.multi_reduction <add>, %104, %cst_60 [1] : vector<8x8xf32> to vector<8xf32>
    %106 = vector.shape_cast %105 : vector<8xf32> to vector<8x1xf32>
    %107 = tpu.reciprocal %106 {approx = true} : vector<8x1xf32> -> vector<8x1xf32>
    %108 = vector.broadcast %107 : vector<8x1xf32> to vector<8x8xf32>
    %109 = arith.mulf %104, %108 : vector<8x8xf32>
    %110 = arith.truncf %109 : vector<8x8xf32> to vector<8x8xbf16>
    %111 = arith.truncf %96 : vector<8x32xf32> to vector<8x32xbf16>
    %cst_61 = arith.constant dense<0.000000e+00> : vector<8x32xf32>
    %112 = tpu.matmul %110, %111, %cst_61 {dimension_numbers = #tpu.dot_dimension_numbers<[1], [0], [0], [1], [0, 0, 1, 1], [], []>} : vector<8x8xbf16>, vector<8x32xbf16>, vector<8x32xf32> -> vector<8x32xf32>
    %113 = arith.truncf %112 : vector<8x32xf32> to vector<8x32xbf16>
    %c1_62 = arith.constant 1 : index
    %c0_63 = arith.constant 0 : index
    %c0_64 = arith.constant 0 : index
    %114 = vector.load %arg3[%c1_62, %c0_63, %c0_64] : memref<3x32x32xbf16, #tpu.memory_space<vmem>>, vector<1x32x32xbf16>
    %115 = vector.shape_cast %114 : vector<1x32x32xbf16> to vector<32x32xbf16>
    %cst_65 = arith.constant dense<0.000000e+00> : vector<8x32xf32>
    %116 = tpu.matmul %113, %115, %cst_65 {dimension_numbers = #tpu.dot_dimension_numbers<[1], [0], [0], [1], [0, 0, 1, 1], [], []>} : vector<8x32xbf16>, vector<32x32xbf16>, vector<8x32xf32> -> vector<8x32xf32>
    %117 = arith.addf %86, %116 : vector<8x32xf32>
    %118 = vector.extract_strided_slice %2 {offsets = [2, 0], sizes = [1, 32], strides = [1, 1]} : vector<6x32xf32> to vector<1x32xf32>
    %cst_66 = arith.constant dense<0.000000e+00> : vector<8xf32>
    %119 = vector.multi_reduction <add>, %117, %cst_66 [1] : vector<8x32xf32> to vector<8xf32>
    %120 = vector.shape_cast %119 : vector<8xf32> to vector<8x1xf32>
    %121 = arith.mulf %117, %117 : vector<8x32xf32>
    %cst_67 = arith.constant dense<0.000000e+00> : vector<8xf32>
    %122 = vector.multi_reduction <add>, %121, %cst_67 [1] : vector<8x32xf32> to vector<8xf32>
    %123 = vector.shape_cast %122 : vector<8xf32> to vector<8x1xf32>
    %cst_68 = arith.constant 3.125000e-02 : f32
    %124 = vector.broadcast %cst_68 : f32 to vector<8x1xf32>
    %125 = arith.mulf %120, %124 : vector<8x1xf32>
    %cst_69 = arith.constant 3.125000e-02 : f32
    %126 = vector.broadcast %cst_69 : f32 to vector<8x1xf32>
    %127 = arith.mulf %123, %126 : vector<8x1xf32>
    %128 = arith.mulf %125, %125 : vector<8x1xf32>
    %129 = arith.subf %127, %128 : vector<8x1xf32>
    %130 = vector.broadcast %125 : vector<8x1xf32> to vector<8x32xf32>
    %131 = arith.subf %117, %130 : vector<8x32xf32>
    %cst_70 = arith.constant 9.99999974E-6 : f32
    %132 = vector.broadcast %cst_70 : f32 to vector<8x1xf32>
    %133 = arith.addf %129, %132 : vector<8x1xf32>
    %134 = math.rsqrt %133 : vector<8x1xf32>
    %135 = vector.broadcast %134 : vector<8x1xf32> to vector<8x32xf32>
    %136 = arith.mulf %131, %135 : vector<8x32xf32>
    %137 = vector.broadcast %118 : vector<1x32xf32> to vector<8x32xf32>
    %138 = arith.mulf %136, %137 : vector<8x32xf32>
    %139 = arith.truncf %138 : vector<8x32xf32> to vector<8x32xbf16>
    %c1_71 = arith.constant 1 : index
    %c0_72 = arith.constant 0 : index
    %c0_73 = arith.constant 0 : index
    %140 = vector.load %arg4[%c1_71, %c0_72, %c0_73] : memref<3x32x32xbf16, #tpu.memory_space<vmem>>, vector<1x32x32xbf16>
    %141 = vector.shape_cast %140 : vector<1x32x32xbf16> to vector<32x32xbf16>
    %cst_74 = arith.constant dense<0.000000e+00> : vector<8x32xf32>
    %142 = tpu.matmul %139, %141, %cst_74 {dimension_numbers = #tpu.dot_dimension_numbers<[1], [0], [0], [1], [0, 0, 1, 1], [], []>} : vector<8x32xbf16>, vector<32x32xbf16>, vector<8x32xf32> -> vector<8x32xf32>
    %cst_75 = arith.constant 0.000000e+00 : f32
    %143 = vector.broadcast %cst_75 : f32 to vector<8x32xf32>
    %144 = arith.maximumf %142, %143 : vector<8x32xf32>
    %145 = arith.truncf %144 : vector<8x32xf32> to vector<8x32xbf16>
    %c1_76 = arith.constant 1 : index
    %c0_77 = arith.constant 0 : index
    %c0_78 = arith.constant 0 : index
    %146 = vector.load %arg5[%c1_76, %c0_77, %c0_78] : memref<3x32x32xbf16, #tpu.memory_space<vmem>>, vector<1x32x32xbf16>
    %147 = vector.shape_cast %146 : vector<1x32x32xbf16> to vector<32x32xbf16>
    %cst_79 = arith.constant dense<0.000000e+00> : vector<8x32xf32>
    %148 = tpu.matmul %145, %147, %cst_79 {dimension_numbers = #tpu.dot_dimension_numbers<[1], [0], [0], [1], [0, 0, 1, 1], [], []>} : vector<8x32xbf16>, vector<32x32xbf16>, vector<8x32xf32> -> vector<8x32xf32>
    %149 = arith.addf %138, %148 : vector<8x32xf32>
    %150 = vector.extract_strided_slice %2 {offsets = [3, 0], sizes = [1, 32], strides = [1, 1]} : vector<6x32xf32> to vector<1x32xf32>
    %cst_80 = arith.constant dense<0.000000e+00> : vector<8xf32>
    %151 = vector.multi_reduction <add>, %149, %cst_80 [1] : vector<8x32xf32> to vector<8xf32>
    %152 = vector.shape_cast %151 : vector<8xf32> to vector<8x1xf32>
    %153 = arith.mulf %149, %149 : vector<8x32xf32>
    %cst_81 = arith.constant dense<0.000000e+00> : vector<8xf32>
    %154 = vector.multi_reduction <add>, %153, %cst_81 [1] : vector<8x32xf32> to vector<8xf32>
    %155 = vector.shape_cast %154 : vector<8xf32> to vector<8x1xf32>
    %cst_82 = arith.constant 3.125000e-02 : f32
    %156 = vector.broadcast %cst_82 : f32 to vector<8x1xf32>
    %157 = arith.mulf %152, %156 : vector<8x1xf32>
    %cst_83 = arith.constant 3.125000e-02 : f32
    %158 = vector.broadcast %cst_83 : f32 to vector<8x1xf32>
    %159 = arith.mulf %155, %158 : vector<8x1xf32>
    %160 = arith.mulf %157, %157 : vector<8x1xf32>
    %161 = arith.subf %159, %160 : vector<8x1xf32>
    %162 = vector.broadcast %157 : vector<8x1xf32> to vector<8x32xf32>
    %163 = arith.subf %149, %162 : vector<8x32xf32>
    %cst_84 = arith.constant 9.99999974E-6 : f32
    %164 = vector.broadcast %cst_84 : f32 to vector<8x1xf32>
    %165 = arith.addf %161, %164 : vector<8x1xf32>
    %166 = math.rsqrt %165 : vector<8x1xf32>
    %167 = vector.broadcast %166 : vector<8x1xf32> to vector<8x32xf32>
    %168 = arith.mulf %163, %167 : vector<8x32xf32>
    %169 = vector.broadcast %150 : vector<1x32xf32> to vector<8x32xf32>
    %170 = arith.mulf %168, %169 : vector<8x32xf32>
    %171 = arith.truncf %170 : vector<8x32xf32> to vector<8x32xbf16>
    %c2_85 = arith.constant 2 : index
    %c0_86 = arith.constant 0 : index
    %c0_87 = arith.constant 0 : index
    %c0_88 = arith.constant 0 : index
    %172 = vector.load %arg2[%c2_85, %c0_86, %c0_87, %c0_88] : memref<3x3x32x32xbf16, #tpu.memory_space<vmem>>, vector<1x1x32x32xbf16>
    %173 = vector.shape_cast %172 : vector<1x1x32x32xbf16> to vector<32x32xbf16>
    %cst_89 = arith.constant dense<0.000000e+00> : vector<8x32xf32>
    %174 = tpu.matmul %171, %173, %cst_89 {dimension_numbers = #tpu.dot_dimension_numbers<[1], [0], [0], [1], [0, 0, 1, 1], [], []>} : vector<8x32xbf16>, vector<32x32xbf16>, vector<8x32xf32> -> vector<8x32xf32>
    %c2_90 = arith.constant 2 : index
    %c1_91 = arith.constant 1 : index
    %c0_92 = arith.constant 0 : index
    %c0_93 = arith.constant 0 : index
    %175 = vector.load %arg2[%c2_90, %c1_91, %c0_92, %c0_93] : memref<3x3x32x32xbf16, #tpu.memory_space<vmem>>, vector<1x1x32x32xbf16>
    %176 = vector.shape_cast %175 : vector<1x1x32x32xbf16> to vector<32x32xbf16>
    %cst_94 = arith.constant dense<0.000000e+00> : vector<8x32xf32>
    %177 = tpu.matmul %171, %176, %cst_94 {dimension_numbers = #tpu.dot_dimension_numbers<[1], [0], [0], [1], [0, 0, 1, 1], [], []>} : vector<8x32xbf16>, vector<32x32xbf16>, vector<8x32xf32> -> vector<8x32xf32>
    %c2_95 = arith.constant 2 : index
    %c2_96 = arith.constant 2 : index
    %c0_97 = arith.constant 0 : index
    %c0_98 = arith.constant 0 : index
    %178 = vector.load %arg2[%c2_95, %c2_96, %c0_97, %c0_98] : memref<3x3x32x32xbf16, #tpu.memory_space<vmem>>, vector<1x1x32x32xbf16>
    %179 = vector.shape_cast %178 : vector<1x1x32x32xbf16> to vector<32x32xbf16>
    %cst_99 = arith.constant dense<0.000000e+00> : vector<8x32xf32>
    %180 = tpu.matmul %171, %179, %cst_99 {dimension_numbers = #tpu.dot_dimension_numbers<[1], [0], [0], [1], [0, 0, 1, 1], [], []>} : vector<8x32xbf16>, vector<32x32xbf16>, vector<8x32xf32> -> vector<8x32xf32>
    %181 = arith.truncf %174 : vector<8x32xf32> to vector<8x32xbf16>
    %182 = arith.truncf %177 : vector<8x32xf32> to vector<8x32xbf16>
    %cst_100 = arith.constant dense<0.000000e+00> : vector<8x8xf32>
    %183 = tpu.matmul %181, %182, %cst_100 {dimension_numbers = #tpu.dot_dimension_numbers<[1], [1], [0], [0], [0, 0, 1, 0], [], []>} : vector<8x32xbf16>, vector<8x32xbf16>, vector<8x8xf32> -> vector<8x8xf32>
    %cst_101 = arith.constant dense<0xFF800000> : vector<8xf32>
    %184 = vector.multi_reduction <maximumf>, %183, %cst_101 [1] : vector<8x8xf32> to vector<8xf32>
    %185 = vector.shape_cast %184 : vector<8xf32> to vector<8x1xf32>
    %186 = vector.broadcast %185 : vector<8x1xf32> to vector<8x8xf32>
    %187 = arith.subf %183, %186 : vector<8x8xf32>
    %188 = math.exp %187 : vector<8x8xf32>
    %cst_102 = arith.constant dense<0.000000e+00> : vector<8xf32>
    %189 = vector.multi_reduction <add>, %188, %cst_102 [1] : vector<8x8xf32> to vector<8xf32>
    %190 = vector.shape_cast %189 : vector<8xf32> to vector<8x1xf32>
    %191 = tpu.reciprocal %190 {approx = true} : vector<8x1xf32> -> vector<8x1xf32>
    %192 = vector.broadcast %191 : vector<8x1xf32> to vector<8x8xf32>
    %193 = arith.mulf %188, %192 : vector<8x8xf32>
    %194 = arith.truncf %193 : vector<8x8xf32> to vector<8x8xbf16>
    %195 = arith.truncf %180 : vector<8x32xf32> to vector<8x32xbf16>
    %cst_103 = arith.constant dense<0.000000e+00> : vector<8x32xf32>
    %196 = tpu.matmul %194, %195, %cst_103 {dimension_numbers = #tpu.dot_dimension_numbers<[1], [0], [0], [1], [0, 0, 1, 1], [], []>} : vector<8x8xbf16>, vector<8x32xbf16>, vector<8x32xf32> -> vector<8x32xf32>
    %197 = arith.truncf %196 : vector<8x32xf32> to vector<8x32xbf16>
    %c2_104 = arith.constant 2 : index
    %c0_105 = arith.constant 0 : index
    %c0_106 = arith.constant 0 : index
    %198 = vector.load %arg3[%c2_104, %c0_105, %c0_106] : memref<3x32x32xbf16, #tpu.memory_space<vmem>>, vector<1x32x32xbf16>
    %199 = vector.shape_cast %198 : vector<1x32x32xbf16> to vector<32x32xbf16>
    %cst_107 = arith.constant dense<0.000000e+00> : vector<8x32xf32>
    %200 = tpu.matmul %197, %199, %cst_107 {dimension_numbers = #tpu.dot_dimension_numbers<[1], [0], [0], [1], [0, 0, 1, 1], [], []>} : vector<8x32xbf16>, vector<32x32xbf16>, vector<8x32xf32> -> vector<8x32xf32>
    %201 = arith.addf %170, %200 : vector<8x32xf32>
    %202 = vector.extract_strided_slice %2 {offsets = [4, 0], sizes = [1, 32], strides = [1, 1]} : vector<6x32xf32> to vector<1x32xf32>
    %cst_108 = arith.constant dense<0.000000e+00> : vector<8xf32>
    %203 = vector.multi_reduction <add>, %201, %cst_108 [1] : vector<8x32xf32> to vector<8xf32>
    %204 = vector.shape_cast %203 : vector<8xf32> to vector<8x1xf32>
    %205 = arith.mulf %201, %201 : vector<8x32xf32>
    %cst_109 = arith.constant dense<0.000000e+00> : vector<8xf32>
    %206 = vector.multi_reduction <add>, %205, %cst_109 [1] : vector<8x32xf32> to vector<8xf32>
    %207 = vector.shape_cast %206 : vector<8xf32> to vector<8x1xf32>
    %cst_110 = arith.constant 3.125000e-02 : f32
    %208 = vector.broadcast %cst_110 : f32 to vector<8x1xf32>
    %209 = arith.mulf %204, %208 : vector<8x1xf32>
    %cst_111 = arith.constant 3.125000e-02 : f32
    %210 = vector.broadcast %cst_111 : f32 to vector<8x1xf32>
    %211 = arith.mulf %207, %210 : vector<8x1xf32>
    %212 = arith.mulf %209, %209 : vector<8x1xf32>
    %213 = arith.subf %211, %212 : vector<8x1xf32>
    %214 = vector.broadcast %209 : vector<8x1xf32> to vector<8x32xf32>
    %215 = arith.subf %201, %214 : vector<8x32xf32>
    %cst_112 = arith.constant 9.99999974E-6 : f32
    %216 = vector.broadcast %cst_112 : f32 to vector<8x1xf32>
    %217 = arith.addf %213, %216 : vector<8x1xf32>
    %218 = math.rsqrt %217 : vector<8x1xf32>
    %219 = vector.broadcast %218 : vector<8x1xf32> to vector<8x32xf32>
    %220 = arith.mulf %215, %219 : vector<8x32xf32>
    %221 = vector.broadcast %202 : vector<1x32xf32> to vector<8x32xf32>
    %222 = arith.mulf %220, %221 : vector<8x32xf32>
    %223 = arith.truncf %222 : vector<8x32xf32> to vector<8x32xbf16>
    %c2_113 = arith.constant 2 : index
    %c0_114 = arith.constant 0 : index
    %c0_115 = arith.constant 0 : index
    %224 = vector.load %arg4[%c2_113, %c0_114, %c0_115] : memref<3x32x32xbf16, #tpu.memory_space<vmem>>, vector<1x32x32xbf16>
    %225 = vector.shape_cast %224 : vector<1x32x32xbf16> to vector<32x32xbf16>
    %cst_116 = arith.constant dense<0.000000e+00> : vector<8x32xf32>
    %226 = tpu.matmul %223, %225, %cst_116 {dimension_numbers = #tpu.dot_dimension_numbers<[1], [0], [0], [1], [0, 0, 1, 1], [], []>} : vector<8x32xbf16>, vector<32x32xbf16>, vector<8x32xf32> -> vector<8x32xf32>
    %cst_117 = arith.constant 0.000000e+00 : f32
    %227 = vector.broadcast %cst_117 : f32 to vector<8x32xf32>
    %228 = arith.maximumf %226, %227 : vector<8x32xf32>
    %229 = arith.truncf %228 : vector<8x32xf32> to vector<8x32xbf16>
    %c2_118 = arith.constant 2 : index
    %c0_119 = arith.constant 0 : index
    %c0_120 = arith.constant 0 : index
    %230 = vector.load %arg5[%c2_118, %c0_119, %c0_120] : memref<3x32x32xbf16, #tpu.memory_space<vmem>>, vector<1x32x32xbf16>
    %231 = vector.shape_cast %230 : vector<1x32x32xbf16> to vector<32x32xbf16>
    %cst_121 = arith.constant dense<0.000000e+00> : vector<8x32xf32>
    %232 = tpu.matmul %229, %231, %cst_121 {dimension_numbers = #tpu.dot_dimension_numbers<[1], [0], [0], [1], [0, 0, 1, 1], [], []>} : vector<8x32xbf16>, vector<32x32xbf16>, vector<8x32xf32> -> vector<8x32xf32>
    %233 = arith.addf %222, %232 : vector<8x32xf32>
    %234 = vector.extract_strided_slice %2 {offsets = [5, 0], sizes = [1, 32], strides = [1, 1]} : vector<6x32xf32> to vector<1x32xf32>
    %cst_122 = arith.constant dense<0.000000e+00> : vector<8xf32>
    %235 = vector.multi_reduction <add>, %233, %cst_122 [1] : vector<8x32xf32> to vector<8xf32>
    %236 = vector.shape_cast %235 : vector<8xf32> to vector<8x1xf32>
    %237 = arith.mulf %233, %233 : vector<8x32xf32>
    %cst_123 = arith.constant dense<0.000000e+00> : vector<8xf32>
    %238 = vector.multi_reduction <add>, %237, %cst_123 [1] : vector<8x32xf32> to vector<8xf32>
    %239 = vector.shape_cast %238 : vector<8xf32> to vector<8x1xf32>
    %cst_124 = arith.constant 3.125000e-02 : f32
    %240 = vector.broadcast %cst_124 : f32 to vector<8x1xf32>
    %241 = arith.mulf %236, %240 : vector<8x1xf32>
    %cst_125 = arith.constant 3.125000e-02 : f32
    %242 = vector.broadcast %cst_125 : f32 to vector<8x1xf32>
    %243 = arith.mulf %239, %242 : vector<8x1xf32>
    %244 = arith.mulf %241, %241 : vector<8x1xf32>
    %245 = arith.subf %243, %244 : vector<8x1xf32>
    %246 = vector.broadcast %241 : vector<8x1xf32> to vector<8x32xf32>
    %247 = arith.subf %233, %246 : vector<8x32xf32>
    %cst_126 = arith.constant 9.99999974E-6 : f32
    %248 = vector.broadcast %cst_126 : f32 to vector<8x1xf32>
    %249 = arith.addf %245, %248 : vector<8x1xf32>
    %250 = math.rsqrt %249 : vector<8x1xf32>
    %251 = vector.broadcast %250 : vector<8x1xf32> to vector<8x32xf32>
    %252 = arith.mulf %247, %251 : vector<8x32xf32>
    %253 = vector.broadcast %234 : vector<1x32xf32> to vector<8x32xf32>
    %254 = arith.mulf %252, %253 : vector<8x32xf32>
    %c0_127 = arith.constant 0 : index
    %c0_128 = arith.constant 0 : index
    %c0_129 = arith.constant 0 : index
    %c0_130 = arith.constant 0 : index
    %255 = vector.load %arg7[%c0_127, %c0_128, %c0_129, %c0_130] : memref<1x2x8x32xf32, #tpu.memory_space<vmem>>, vector<1x1x8x32xf32>
    %256 = vector.shape_cast %255 : vector<1x1x8x32xf32> to vector<8x32xf32>
    %257 = vector.shape_cast %170 : vector<8x32xf32> to vector<1x1x8x32xf32>
    tpu.vector_store %arg7[%c0_127, %c0_128, %c0_129, %c0_130], %257 {strides = array<i32>} : memref<1x2x8x32xf32, #tpu.memory_space<vmem>>, vector<1x1x8x32xf32>,
    %c0_131 = arith.constant 0 : index
    %c1_132 = arith.constant 1 : index
    %c0_133 = arith.constant 0 : index
    %c0_134 = arith.constant 0 : index
    %258 = vector.load %arg7[%c0_131, %c1_132, %c0_133, %c0_134] : memref<1x2x8x32xf32, #tpu.memory_space<vmem>>, vector<1x1x8x32xf32>
    %259 = vector.shape_cast %258 : vector<1x1x8x32xf32> to vector<8x32xf32>
    %260 = vector.shape_cast %254 : vector<8x32xf32> to vector<1x1x8x32xf32>
    tpu.vector_store %arg7[%c0_131, %c1_132, %c0_133, %c0_134], %260 {strides = array<i32>} : memref<1x2x8x32xf32, #tpu.memory_space<vmem>>, vector<1x1x8x32xf32>,
    return
  }
  func.func @transform_0(%arg0: i32) -> (i32, i32, i32) {
    %c0_i32 = arith.constant 0 : i32
    %c0_i32_0 = arith.constant 0 : i32
    %c0_i32_1 = arith.constant 0 : i32
    return %arg0, %c0_i32, %c0_i32_0 : i32, i32, i32
  }
  func.func @transform_1(%arg0: i32) -> (i32, i32, i32, i32) {
    %c0_i32 = arith.constant 0 : i32
    %c0_i32_0 = arith.constant 0 : i32
    %c0_i32_1 = arith.constant 0 : i32
    %c0_i32_2 = arith.constant 0 : i32
    %c0_i32_3 = arith.constant 0 : i32
    return %c0_i32, %c0_i32_0, %c0_i32_1, %c0_i32_2 : i32, i32, i32, i32
  }
  func.func @transform_2(%arg0: i32) -> (i32, i32, i32) {
    %c0_i32 = arith.constant 0 : i32
    %c0_i32_0 = arith.constant 0 : i32
    %c0_i32_1 = arith.constant 0 : i32
    %c0_i32_2 = arith.constant 0 : i32
    return %c0_i32, %c0_i32_0, %c0_i32_1 : i32, i32, i32
  }
  func.func @transform_3(%arg0: i32) -> (i32, i32, i32) {
    %c0_i32 = arith.constant 0 : i32
    %c0_i32_0 = arith.constant 0 : i32
    %c0_i32_1 = arith.constant 0 : i32
    %c0_i32_2 = arith.constant 0 : i32
    return %c0_i32, %c0_i32_0, %c0_i32_1 : i32, i32, i32
  }
  func.func @transform_4(%arg0: i32) -> (i32, i32, i32) {
    %c0_i32 = arith.constant 0 : i32
    %c0_i32_0 = arith.constant 0 : i32
    %c0_i32_1 = arith.constant 0 : i32
    %c0_i32_2 = arith.constant 0 : i32
    return %c0_i32, %c0_i32_0, %c0_i32_1 : i32, i32, i32
  }
  func.func @transform_5(%arg0: i32) -> (i32, i32) {
    %c0_i32 = arith.constant 0 : i32
    %c0_i32_0 = arith.constant 0 : i32
    %c0_i32_1 = arith.constant 0 : i32
    return %c0_i32, %c0_i32_0 : i32, i32
  }
  func.func @transform_6(%arg0: i32) -> (i32, i32, i32, i32) {
    %c0_i32 = arith.constant 0 : i32
    %c0_i32_0 = arith.constant 0 : i32
    %c0_i32_1 = arith.constant 0 : i32
    %c0_i32_2 = arith.constant 0 : i32
    return %arg0, %c0_i32, %c0_i32_0, %c0_i32_1 : i32, i32, i32, i32
  }
}

</mosaic_0001>

<llo_original>
// kernel: predictive_block_forward.1
$region0: #{predictive_block_forward.1}
  #allocation0 [shape = 'u32[]', space=smem, size = 0x4, offset = 0x4, fixed_abs, tag = 'smem constant byte address 0x4 - core index']
  #allocation1 [shape = 'u32[144,128]{1,0:T(1,128)}', space=vmem, size = 0x12000, scoped, tag = 'internal scratch']
  %s0 = inlined_call_operand.vmem [shape: f32[1,8,32], index: 0, kind: input, shape index: {}]
  %s1 = inlined_call_operand.hbm [shape: bf16[3,3,32,32], index: 1, kind: input, shape index: {}]
  %s2 = inlined_call_operand.hbm [shape: bf16[3,32,32], index: 2, kind: input, shape index: {}]
  %s3 = inlined_call_operand.hbm [shape: bf16[3,32,32], index: 3, kind: input, shape index: {}]
  %s4 = inlined_call_operand.hbm [shape: bf16[3,32,32], index: 4, kind: input, shape index: {}]
  %s5 = inlined_call_operand.hbm [shape: f32[6,32], index: 5, kind: input, shape index: {}]
  %s6 = inlined_call_operand.vmem [shape: f32[1,2,8,32], index: 6, kind: output, shape index: {}]
  %s7 = sld [smem:[#allocation0]]
  $region54: #{predictive_block_forward.1} parent=0
    _
  %s9 = ssub.s32 1, %s7
  %s10 = scalar_select 0, %s9, %s7
  $region1: #{predictive_block_forward.1} parent=0
    #allocation2 [shape = 'u8[73728]{0}', space=vmem, size = 0x12000, scoped, tag = 'input window, operand 1, single buffered']
    #allocation3 [shape = 's32[1]{0}', space=sflag, size = 0x4, scoped, tag = 'scoped memory for predictive_block_forward.1']
    #allocation4 [shape = 'u8[24576]{0}', space=vmem, size = 0x6000, scoped, tag = 'input window, operand 2, single buffered']
    #allocation5 [shape = 's32[1]{0}', space=sflag, size = 0x4, scoped, tag = 'scoped memory for predictive_block_forward.1']
    #allocation6 [shape = 'u8[24576]{0}', space=vmem, size = 0x6000, scoped, tag = 'input window, operand 3, single buffered']
    #allocation7 [shape = 'u8[24576]{0}', space=vmem, size = 0x6000, scoped, tag = 'input window, operand 4, single buffered']
    #allocation8 [shape = 's32[1]{0}', space=sflag, size = 0x4, scoped, tag = 'scoped memory for predictive_block_forward.1']
    #allocation9 [shape = 'u8[4096]{0}', space=vmem, size = 0x1000, scoped, tag = 'input window, operand 5, single buffered']
    %11 = vsyncpa [#allocation3], 0
    %12 = vsyncpa [#allocation5], 0
    %13 = vsyncpa [#allocation8], 0
    // Predicated region
    $region2: #{predictive_block_forward.1} parent=1 // pred_check
      _
    $region3: #{predictive_block_forward.1} parent=1 // pred_check_branch
      %15 = sbr.rel (0) target = $region5
    $region4: #{predictive_block_forward.1} parent=1 // pred_region
      _
    $region5: #{predictive_block_forward.1} parent=1 // pred_fallthru
      _
    // Predicated region
    $region6: #{predictive_block_forward.1} parent=1 // pred_check
      _
    $region7: #{predictive_block_forward.1} parent=1 // pred_check_branch
      %17 = sbr.rel (0) target = $region9
    $region8: #{predictive_block_forward.1} parent=1 // pred_region
      %s19 = ssub.s32 2304, 2304
      %20 = vsyncadd [#allocation3], %s19
      %s21 = sshll.u32 [#allocation2], 4
      %s22 = int_to_ptr.vmem [resolvable:$true] %s21
      %27 = dma.hbm_to_vmem [thread:$0]  %s1, 2304, %s22, [#allocation3], 64, 64, 4
    $region9: #{predictive_block_forward.1} parent=1 // pred_fallthru
      _
    // Predicated region
    $region10: #{predictive_block_forward.1} parent=1 // pred_check
      _
    $region11: #{predictive_block_forward.1} parent=1 // pred_check_branch
      %29 = sbr.rel (0) target = $region13
    $region12: #{predictive_block_forward.1} parent=1 // pred_region
      %s31 = ssub.s32 768, 768
      %32 = vsyncadd [#allocation5], %s31
      %s33 = sshll.u32 [#allocation4], 4
      %s34 = int_to_ptr.vmem [resolvable:$true] %s33
      %39 = dma.hbm_to_vmem [thread:$0]  %s2, 768, %s34, [#allocation5], 64, 64, 4
    $region13: #{predictive_block_forward.1} parent=1 // pred_fallthru
      _
    // Predicated region
    $region14: #{predictive_block_forward.1} parent=1 // pred_check
      _
    $region15: #{predictive_block_forward.1} parent=1 // pred_check_branch
      %41 = sbr.rel (0) target = $region17
    $region16: #{predictive_block_forward.1} parent=1 // pred_region
      %s43 = ssub.s32 768, 768
      %44 = vsyncadd [#allocation5], %s43
      %s45 = sshll.u32 [#allocation6], 4
      %s46 = int_to_ptr.vmem [resolvable:$true] %s45
      %51 = dma.hbm_to_vmem [thread:$0]  %s3, 768, %s46, [#allocation5], 64, 64, 4
    $region17: #{predictive_block_forward.1} parent=1 // pred_fallthru
      _
    // Predicated region
    $region18: #{predictive_block_forward.1} parent=1 // pred_check
      _
    $region19: #{predictive_block_forward.1} parent=1 // pred_check_branch
      %53 = sbr.rel (0) target = $region21
    $region20: #{predictive_block_forward.1} parent=1 // pred_region
      %s55 = ssub.s32 768, 768
      %56 = vsyncadd [#allocation8], %s55
      %s57 = sshll.u32 [#allocation7], 4
      %s58 = int_to_ptr.vmem [resolvable:$true] %s57
      %63 = dma.hbm_to_vmem [thread:$0]  %s4, 768, %s58, [#allocation8], 64, 64, 4
    $region21: #{predictive_block_forward.1} parent=1 // pred_fallthru
      _
    // Predicated region
    $region22: #{predictive_block_forward.1} parent=1 // pred_check
      _
    $region23: #{predictive_block_forward.1} parent=1 // pred_check_branch
      %65 = sbr.rel (0) target = $region25
    $region24: #{predictive_block_forward.1} parent=1 // pred_region
      %s67 = ssub.s32 128, 128
      %68 = vsyncadd [#allocation8], %s67
      %s70 = sshll.u32 [#allocation9], 4
      %s71 = int_to_ptr.vmem [resolvable:$true] %s70
      %73 = dma.hbm_to_vmem [thread:$0]  %s5, 128, %s71, [#allocation8]
    $region25: #{predictive_block_forward.1} parent=1 // pred_fallthru
      _
    // Predicated region
    $region26: #{predictive_block_forward.1} parent=1 // pred_check
      _
    $region27: #{predictive_block_forward.1} parent=1 // pred_check_branch
      %75 = sbr.rel (0) target = $region29
    $region28: #{predictive_block_forward.1} parent=1 // pred_region
      %76 = dma.done [#allocation3], 2304
    $region29: #{predictive_block_forward.1} parent=1 // pred_fallthru
      _
    // Predicated region
    $region30: #{predictive_block_forward.1} parent=1 // pred_check
      _
    $region31: #{predictive_block_forward.1} parent=1 // pred_check_branch
      %78 = sbr.rel (0) target = $region33
    $region32: #{predictive_block_forward.1} parent=1 // pred_region
      %79 = dma.done [#allocation5], 768
    $region33: #{predictive_block_forward.1} parent=1 // pred_fallthru
      _
    // Predicated region
    $region34: #{predictive_block_forward.1} parent=1 // pred_check
      _
    $region35: #{predictive_block_forward.1} parent=1 // pred_check_branch
      %81 = sbr.rel (0) target = $region37
    $region36: #{predictive_block_forward.1} parent=1 // pred_region
      %82 = dma.done [#allocation5], 768
    $region37: #{predictive_block_forward.1} parent=1 // pred_fallthru
      _
    // Predicated region
    $region38: #{predictive_block_forward.1} parent=1 // pred_check
      _
    $region39: #{predictive_block_forward.1} parent=1 // pred_check_branch
      %84 = sbr.rel (0) target = $region41
    $region40: #{predictive_block_forward.1} parent=1 // pred_region
      %85 = dma.done [#allocation8], 768
    $region41: #{predictive_block_forward.1} parent=1 // pred_fallthru
      _
    // Predicated region
    $region42: #{predictive_block_forward.1} parent=1 // pred_check
      _
    $region43: #{predictive_block_forward.1} parent=1 // pred_check_branch
      %87 = sbr.rel (0) target = $region45
    $region44: #{predictive_block_forward.1} parent=1 // pred_region
      %88 = dma.done [#allocation8], 128
    $region45: #{predictive_block_forward.1} parent=1 // pred_fallthru
      _
    %v90 = vld [vmem:[%s0] sm:$0xff]
    %v91 = vld [vmem:[#allocation9] sm:$0x3f]
    %v92 = vpack.c.bf16 %v90, %v90
    %v93 = vld [vmem:[#allocation2] sm:$0xf]
    %v94 = vld [vmem:[#allocation2 + $0x4] sm:$0xf]
    %v95 = vld [vmem:[#allocation2 + $0x8] sm:$0xf]
    %v96 = vld [vmem:[#allocation2 + $0xc] sm:$0xf]
    %v101 = vunpack.c.l.b16 %v93
    %v102 = vunpack.c.l.b16 %v94
    %v103 = vunpack.c.l.b16 %v95
    %v104 = vunpack.c.l.b16 %v96
    %v105 = vpack.c.b16 %v102, %v101
    %v106 = vpack.c.b16 %v104, %v103
    %vm109 = vcmask 261120
    %v111 = vsel %vm109, %v92, 0
    %113 = vmatprep.subr.bf16.mxu0 0
    %114 = vmatpush1.bf16.msra.mxu0 0
    %115 = vmatprep.subr.bf16.mxu0 0
    %116 = vmatpush1.bf16.msra.mxu0 0
    %117 = vmatprep.subr.bf16.mxu0 0
    %118 = vmatpush1.bf16.msra.mxu0 0
    %119 = vmatprep.subr.bf16.mxu0 0
    %120 = vmatpush1.bf16.msra.mxu0 0
    %121 = vmatprep.subr.bf16.mxu0 0
    %122 = vmatpush1.bf16.msra.mxu0 0
    %123 = vmatprep.subr.bf16.mxu0 0
    %124 = vmatpush1.bf16.msra.mxu0 0
    %125 = vmatprep.subr.bf16.mxu0 0
    %126 = vmatpush1.bf16.msra.mxu0 %v106
    %127 = vmatprep.subr.bf16.mxu0 0
    %128 = vmatpush1.bf16.msra.mxu0 %v105
    %129 = vmatprep.subr.bf16.mxu0 0
    %130 = vmatpush2.bf16.msra.mxu0 0
    %131 = vmatprep.subr.bf16.mxu0 0
    %132 = vmatpush2.bf16.msra.mxu0 0
    %133 = vmatprep.subr.bf16.mxu0 0
    %134 = vmatpush2.bf16.msra.mxu0 0
    %135 = vmatprep.subr.bf16.mxu0 0
    %136 = vmatpush2.bf16.msra.mxu0 0
    %137 = vmatprep.subr.bf16.mxu0 0
    %138 = vmatpush2.bf16.msra.mxu0 0
    %139 = vmatprep.subr.bf16.mxu0 0
    %140 = vmatpush2.bf16.msra.mxu0 0
    %141 = vmatprep.subr.bf16.mxu0 0
    %142 = vmatpush2.bf16.msra.mxu0 0
    %143 = vmatprep.subr.bf16.mxu0 0
    %144 = vmatpush2.bf16.msra.mxu0 0
    %145 = vmatprep.mubr.bf16.mxu0 0
    %146 = vmatmul.mubr.bf16.gmra.mxu0 %v111
    %v147 = vpop.f32.mrf.mxu0
    %v148 = vadd.f32 0.0, %v147
    %v149 = vpop.f32.mrf.mxu0
    %v150 = vpop.f32.mrf.mxu0
    %v151 = vpop.f32.mrf.mxu0
    %152 = vdwg.mxu0
    %s153 = scalar_lea.vmem [#allocation2], 16
    %v154 = vld [vmem:[%s153] sm:$0xf]
    %v155 = vld [vmem:[%s153 + $0x4] sm:$0xf]
    %v156 = vld [vmem:[%s153 + $0x8] sm:$0xf]
    %v157 = vld [vmem:[%s153 + $0xc] sm:$0xf]
    %v162 = vunpack.c.l.b16 %v154
    %v163 = vunpack.c.l.b16 %v155
    %v164 = vunpack.c.l.b16 %v156
    %v165 = vunpack.c.l.b16 %v157
    %v166 = vpack.c.b16 %v163, %v162
    %v167 = vpack.c.b16 %v165, %v164
    %170 = vmatprep.subr.bf16.mxu0 0
    %171 = vmatpush1.bf16.msra.mxu0 0
    %172 = vmatprep.subr.bf16.mxu0 0
    %173 = vmatpush1.bf16.msra.mxu0 0
    %174 = vmatprep.subr.bf16.mxu0 0
    %175 = vmatpush1.bf16.msra.mxu0 0
    %176 = vmatprep.subr.bf16.mxu0 0
    %177 = vmatpush1.bf16.msra.mxu0 0
    %178 = vmatprep.subr.bf16.mxu0 0
    %179 = vmatpush1.bf16.msra.mxu0 0
    %180 = vmatprep.subr.bf16.mxu0 0
    %181 = vmatpush1.bf16.msra.mxu0 0
    %182 = vmatprep.subr.bf16.mxu0 0
    %183 = vmatpush1.bf16.msra.mxu0 %v167
    %184 = vmatprep.subr.bf16.mxu0 0
    %185 = vmatpush1.bf16.msra.mxu0 %v166
    %186 = vmatprep.subr.bf16.mxu0 0
    %187 = vmatpush2.bf16.msra.mxu0 0
    %188 = vmatprep.subr.bf16.mxu0 0
    %189 = vmatpush2.bf16.msra.mxu0 0
    %190 = vmatprep.subr.bf16.mxu0 0
    %191 = vmatpush2.bf16.msra.mxu0 0
    %192 = vmatprep.subr.bf16.mxu0 0
    %193 = vmatpush2.bf16.msra.mxu0 0
    %194 = vmatprep.subr.bf16.mxu0 0
    %195 = vmatpush2.bf16.msra.mxu0 0
    %196 = vmatprep.subr.bf16.mxu0 0
    %197 = vmatpush2.bf16.msra.mxu0 0
    %198 = vmatprep.subr.bf16.mxu0 0
    %199 = vmatpush2.bf16.msra.mxu0 0
    %200 = vmatprep.subr.bf16.mxu0 0
    %201 = vmatpush2.bf16.msra.mxu0 0
    %202 = vmatprep.mubr.bf16.mxu0 0
    %203 = vmatmul.mubr.bf16.gmra.mxu0 %v111
    %v204 = vpop.f32.mrf.mxu0
    %v205 = vadd.f32 0.0, %v204
    %v206 = vpop.f32.mrf.mxu0
    %v207 = vpop.f32.mrf.mxu0
    %v208 = vpop.f32.mrf.mxu0
    %209 = vdwg.mxu0
    %s210 = scalar_lea.vmem [#allocation2], 32
    %v211 = vld [vmem:[%s210] sm:$0xf]
    %v212 = vld [vmem:[%s210 + $0x4] sm:$0xf]
    %v213 = vld [vmem:[%s210 + $0x8] sm:$0xf]
    %v214 = vld [vmem:[%s210 + $0xc] sm:$0xf]
    %v219 = vunpack.c.l.b16 %v211
    %v220 = vunpack.c.l.b16 %v212
    %v221 = vunpack.c.l.b16 %v213
    %v222 = vunpack.c.l.b16 %v214
    %v223 = vpack.c.b16 %v220, %v219
    %v224 = vpack.c.b16 %v222, %v221
    %227 = vmatprep.subr.bf16.mxu0 0
    %228 = vmatpush1.bf16.msra.mxu0 0
    %229 = vmatprep.subr.bf16.mxu0 0
    %230 = vmatpush1.bf16.msra.mxu0 0
    %231 = vmatprep.subr.bf16.mxu0 0
    %232 = vmatpush1.bf16.msra.mxu0 0
    %233 = vmatprep.subr.bf16.mxu0 0
    %234 = vmatpush1.bf16.msra.mxu0 0
    %235 = vmatprep.subr.bf16.mxu0 0
    %236 = vmatpush1.bf16.msra.mxu0 0
    %237 = vmatprep.subr.bf16.mxu0 0
    %238 = vmatpush1.bf16.msra.mxu0 0
    %239 = vmatprep.subr.bf16.mxu0 0
    %240 = vmatpush1.bf16.msra.mxu0 %v224
    %241 = vmatprep.subr.bf16.mxu0 0
    %242 = vmatpush1.bf16.msra.mxu0 %v223
    %243 = vmatprep.subr.bf16.mxu0 0
    %244 = vmatpush2.bf16.msra.mxu0 0
    %245 = vmatprep.subr.bf16.mxu0 0
    %246 = vmatpush2.bf16.msra.mxu0 0
    %247 = vmatprep.subr.bf16.mxu0 0
    %248 = vmatpush2.bf16.msra.mxu0 0
    %249 = vmatprep.subr.bf16.mxu0 0
    %250 = vmatpush2.bf16.msra.mxu0 0
    %251 = vmatprep.subr.bf16.mxu0 0
    %252 = vmatpush2.bf16.msra.mxu0 0
    %253 = vmatprep.subr.bf16.mxu0 0
    %254 = vmatpush2.bf16.msra.mxu0 0
    %255 = vmatprep.subr.bf16.mxu0 0
    %256 = vmatpush2.bf16.msra.mxu0 0
    %257 = vmatprep.subr.bf16.mxu0 0
    %258 = vmatpush2.bf16.msra.mxu0 0
    %259 = vmatprep.mubr.bf16.mxu0 0
    %260 = vmatmul.mubr.bf16.gmra.mxu0 %v111
    %v261 = vpop.f32.mrf.mxu0
    %v262 = vadd.f32 0.0, %v261
    %v263 = vpop.f32.mrf.mxu0
    %v264 = vpop.f32.mrf.mxu0
    %v265 = vpop.f32.mrf.mxu0
    %266 = vdwg.mxu0
    %v267 = vpack.c.bf16 %v148, %v148
    %v268 = vpack.c.bf16 %v205, %v205
    %v270 = vsel %vm109, %v267, 0
    %v273 = vsel %vm109, %v268, 0
    %275 = vmatprep.subr.bf16.mxu0 0
    %276 = vmatpush1.bf16.xpose.msra.mxu0 0
    %277 = vmatprep.subr.bf16.mxu0 0
    %278 = vmatpush1.bf16.xpose.msra.mxu0 0
    %279 = vmatprep.subr.bf16.mxu0 0
    %280 = vmatpush1.bf16.xpose.msra.mxu0 0
    %281 = vmatprep.subr.bf16.mxu0 0
    %282 = vmatpush1.bf16.xpose.msra.mxu0 0
    %283 = vmatprep.subr.bf16.mxu0 0
    %284 = vmatpush1.bf16.xpose.msra.mxu0 0
    %285 = vmatprep.subr.bf16.mxu0 0
    %286 = vmatpush1.bf16.xpose.msra.mxu0 0
    %287 = vmatprep.subr.bf16.mxu0 0
    %288 = vmatpush1.bf16.xpose.msra.mxu0 0
    %289 = vmatprep.subr.bf16.mxu0 0
    %290 = vmatpush1.bf16.xpose.msra.mxu0 %v273
    %291 = vmatprep.subr.bf16.mxu0 0
    %292 = vmatpush2.bf16.xpose.msra.mxu0 0
    %293 = vmatprep.subr.bf16.mxu0 0
    %294 = vmatpush2.bf16.xpose.msra.mxu0 0
    %295 = vmatprep.subr.bf16.mxu0 0
    %296 = vmatpush2.bf16.xpose.msra.mxu0 0
    %297 = vmatprep.subr.bf16.mxu0 0
    %298 = vmatpush2.bf16.xpose.msra.mxu0 0
    %299 = vmatprep.subr.bf16.mxu0 0
    %300 = vmatpush2.bf16.xpose.msra.mxu0 0
    %301 = vmatprep.subr.bf16.mxu0 0
    %302 = vmatpush2.bf16.xpose.msra.mxu0 0
    %303 = vmatprep.subr.bf16.mxu0 0
    %304 = vmatpush2.bf16.xpose.msra.mxu0 0
    %305 = vmatprep.subr.bf16.mxu0 0
    %306 = vmatpush2.bf16.xpose.msra.mxu0 0
    %307 = vmatprep.mubr.bf16.mxu0 0
    %308 = vmatmul.mubr.bf16.gmra.mxu0 %v270
    %v309 = vpop.f32.mrf.mxu0
    %v310 = vadd.f32 0.0, %v309
    %v311 = vpop.f32.mrf.mxu0
    %v312 = vpop.f32.mrf.mxu0
    %v313 = vpop.f32.mrf.mxu0
    %314 = vdwg.mxu0
    %vm315 = vcmask 64512
    %v316 = vsel %vm315, %v310, -inf
    %317 = vmax.xlane.f32.xlu0 %v316
    %v318 = vpop.xlane.xlu0 %317
    %v319 = vsub.f32 %v310, %v318
    %v320 = vmul.f32 %v319, 1.442695
    %v321 = vpow.pop %v320
    %v322 = vsel %vm315, %v321, 0.0
    %323 = vadd.xlane.f32.xlu0 %v322
    %v324 = vpop.xlane.xlu0 %323
    %v325 = vrcp.pop %v324
    %v326 = vmul.f32 %v321, %v325
    %v327 = vpack.c.bf16 %v326, %v326
    %v328 = vpack.c.bf16 %v262, %v262
    %v330 = vsel %vm315, %v327, 0
    %vm332 = vcmask 1043456
    %v334 = vsel %vm332, %v328, 0
    %336 = vmatprep.subr.bf16.mxu0 0
    %337 = vmatpush1.bf16.msra.mxu0 0
    %338 = vmatprep.subr.bf16.mxu0 0
    %339 = vmatpush1.bf16.msra.mxu0 0
    %340 = vmatprep.subr.bf16.mxu0 0
    %341 = vmatpush1.bf16.msra.mxu0 0
    %342 = vmatprep.subr.bf16.mxu0 0
    %343 = vmatpush1.bf16.msra.mxu0 0
    %344 = vmatprep.subr.bf16.mxu0 0
    %345 = vmatpush1.bf16.msra.mxu0 0
    %346 = vmatprep.subr.bf16.mxu0 0
    %347 = vmatpush1.bf16.msra.mxu0 0
    %348 = vmatprep.subr.bf16.mxu0 0
    %349 = vmatpush1.bf16.msra.mxu0 0
    %350 = vmatprep.subr.bf16.mxu0 0
    %351 = vmatpush1.bf16.msra.mxu0 %v334
    %352 = vmatprep.subr.bf16.mxu0 0
    %353 = vmatpush2.bf16.msra.mxu0 0
    %354 = vmatprep.subr.bf16.mxu0 0
    %355 = vmatpush2.bf16.msra.mxu0 0
    %356 = vmatprep.subr.bf16.mxu0 0
    %357 = vmatpush2.bf16.msra.mxu0 0
    %358 = vmatprep.subr.bf16.mxu0 0
    %359 = vmatpush2.bf16.msra.mxu0 0
    %360 = vmatprep.subr.bf16.mxu0 0
    %361 = vmatpush2.bf16.msra.mxu0 0
    %362 = vmatprep.subr.bf16.mxu0 0
    %363 = vmatpush2.bf16.msra.mxu0 0
    %364 = vmatprep.subr.bf16.mxu0 0
    %365 = vmatpush2.bf16.msra.mxu0 0
    %366 = vmatprep.subr.bf16.mxu0 0
    %367 = vmatpush2.bf16.msra.mxu0 0
    %368 = vmatprep.mubr.bf16.mxu0 0
    %369 = vmatmul.mubr.bf16.gmra.mxu0 %v330
    %v370 = vpop.f32.mrf.mxu0
    %v371 = vadd.f32 0.0, %v370
    %v372 = vpop.f32.mrf.mxu0
    %v373 = vpop.f32.mrf.mxu0
    %v374 = vpop.f32.mrf.mxu0
    %375 = vdwg.mxu0
    %v376 = vpack.c.bf16 %v371, %v371
    %v377 = vld [vmem:[#allocation4] sm:$0xf]
    %v378 = vld [vmem:[#allocation4 + $0x4] sm:$0xf]
    %v379 = vld [vmem:[#allocation4 + $0x8] sm:$0xf]
    %v380 = vld [vmem:[#allocation4 + $0xc] sm:$0xf]
    %v385 = vunpack.c.l.b16 %v377
    %v386 = vunpack.c.l.b16 %v378
    %v387 = vunpack.c.l.b16 %v379
    %v388 = vunpack.c.l.b16 %v380
    %v389 = vpack.c.b16 %v386, %v385
    %v390 = vpack.c.b16 %v388, %v387
    %v394 = vsel %vm109, %v376, 0
    %396 = vmatprep.subr.bf16.mxu0 0
    %397 = vmatpush1.bf16.msra.mxu0 0
    %398 = vmatprep.subr.bf16.mxu0 0
    %399 = vmatpush1.bf16.msra.mxu0 0
    %400 = vmatprep.subr.bf16.mxu0 0
    %401 = vmatpush1.bf16.msra.mxu0 0
    %402 = vmatprep.subr.bf16.mxu0 0
    %403 = vmatpush1.bf16.msra.mxu0 0
    %404 = vmatprep.subr.bf16.mxu0 0
    %405 = vmatpush1.bf16.msra.mxu0 0
    %406 = vmatprep.subr.bf16.mxu0 0
    %407 = vmatpush1.bf16.msra.mxu0 0
    %408 = vmatprep.subr.bf16.mxu0 0
    %409 = vmatpush1.bf16.msra.mxu0 %v390
    %410 = vmatprep.subr.bf16.mxu0 0
    %411 = vmatpush1.bf16.msra.mxu0 %v389
    %412 = vmatprep.subr.bf16.mxu0 0
    %413 = vmatpush2.bf16.msra.mxu0 0
    %414 = vmatprep.subr.bf16.mxu0 0
    %415 = vmatpush2.bf16.msra.mxu0 0
    %416 = vmatprep.subr.bf16.mxu0 0
    %417 = vmatpush2.bf16.msra.mxu0 0
    %418 = vmatprep.subr.bf16.mxu0 0
    %419 = vmatpush2.bf16.msra.mxu0 0
    %420 = vmatprep.subr.bf16.mxu0 0
    %421 = vmatpush2.bf16.msra.mxu0 0
    %422 = vmatprep.subr.bf16.mxu0 0
    %423 = vmatpush2.bf16.msra.mxu0 0
    %424 = vmatprep.subr.bf16.mxu0 0
    %425 = vmatpush2.bf16.msra.mxu0 0
    %426 = vmatprep.subr.bf16.mxu0 0
    %427 = vmatpush2.bf16.msra.mxu0 0
    %428 = vmatprep.mubr.bf16.mxu0 0
    %429 = vmatmul.mubr.bf16.gmra.mxu0 %v394
    %v430 = vpop.f32.mrf.mxu0
    %v431 = vadd.f32 0.0, %v430
    %v432 = vpop.f32.mrf.mxu0
    %v433 = vpop.f32.mrf.mxu0
    %v434 = vpop.f32.mrf.mxu0
    %435 = vdwg.mxu0
    %v436 = vadd.f32 %v90, %v431
    %v437 = vsel %vm109, %v436, 0.0
    %438 = vadd.xlane.f32.xlu0 %v437
    %v439 = vpop.xlane.xlu0 %438
    %v440 = vmul.f32 %v436, %v436
    %v441 = vsel %vm109, %v440, 0.0
    %442 = vadd.xlane.f32.xlu0 %v441
    %v443 = vpop.xlane.xlu0 %442
    %v444 = vmul.f32 %v439, 0.03125
    %v445 = vmul.f32 %v443, 0.03125
    %v446 = vmul.f32 %v444, %v444
    %v447 = vsub.f32 %v445, %v446
    %v448 = vsub.f32 %v436, %v444
    %v449 = vadd.f32 %v447, 1e-05
    %v450 = vrsqrt.pop %v449
    %v451 = vmul.f32 %v448, %v450
    %v452 = vlaneseq
    %v453 = vshrl.u32 %v452, 7
    %v454 = vsub.s32 0, %v453
    %v455 = vrot.slane %v91, %v454
    %v456 = vmul.f32 %v451, %v455
    %v457 = vpack.c.bf16 %v456, %v456
    %v458 = vld [vmem:[#allocation6] sm:$0xf]
    %v459 = vld [vmem:[#allocation6 + $0x4] sm:$0xf]
    %v460 = vld [vmem:[#allocation6 + $0x8] sm:$0xf]
    %v461 = vld [vmem:[#allocation6 + $0xc] sm:$0xf]
    %v466 = vunpack.c.l.b16 %v458
    %v467 = vunpack.c.l.b16 %v459
    %v468 = vunpack.c.l.b16 %v460
    %v469 = vunpack.c.l.b16 %v461
    %v470 = vpack.c.b16 %v467, %v466
    %v471 = vpack.c.b16 %v469, %v468
    %v475 = vsel %vm109, %v457, 0
    %477 = vmatprep.subr.bf16.mxu0 0
    %478 = vmatpush1.bf16.msra.mxu0 0
    %479 = vmatprep.subr.bf16.mxu0 0
    %480 = vmatpush1.bf16.msra.mxu0 0
    %481 = vmatprep.subr.bf16.mxu0 0
    %482 = vmatpush1.bf16.msra.mxu0 0
    %483 = vmatprep.subr.bf16.mxu0 0
    %484 = vmatpush1.bf16.msra.mxu0 0
    %485 = vmatprep.subr.bf16.mxu0 0
    %486 = vmatpush1.bf16.msra.mxu0 0
    %487 = vmatprep.subr.bf16.mxu0 0
    %488 = vmatpush1.bf16.msra.mxu0 0
    %489 = vmatprep.subr.bf16.mxu0 0
    %490 = vmatpush1.bf16.msra.mxu0 %v471
    %491 = vmatprep.subr.bf16.mxu0 0
    %492 = vmatpush1.bf16.msra.mxu0 %v470
    %493 = vmatprep.subr.bf16.mxu0 0
    %494 = vmatpush2.bf16.msra.mxu0 0
    %495 = vmatprep.subr.bf16.mxu0 0
    %496 = vmatpush2.bf16.msra.mxu0 0
    %497 = vmatprep.subr.bf16.mxu0 0
    %498 = vmatpush2.bf16.msra.mxu0 0
    %499 = vmatprep.subr.bf16.mxu0 0
    %500 = vmatpush2.bf16.msra.mxu0 0
    %501 = vmatprep.subr.bf16.mxu0 0
    %502 = vmatpush2.bf16.msra.mxu0 0
    %503 = vmatprep.subr.bf16.mxu0 0
    %504 = vmatpush2.bf16.msra.mxu0 0
    %505 = vmatprep.subr.bf16.mxu0 0
    %506 = vmatpush2.bf16.msra.mxu0 0
    %507 = vmatprep.subr.bf16.mxu0 0
    %508 = vmatpush2.bf16.msra.mxu0 0
    %509 = vmatprep.mubr.bf16.mxu0 0
    %510 = vmatmul.mubr.bf16.gmra.mxu0 %v475
    %v511 = vpop.f32.mrf.mxu0
    %v512 = vadd.f32 0.0, %v511
    %v513 = vpop.f32.mrf.mxu0
    %v514 = vpop.f32.mrf.mxu0
    %v515 = vpop.f32.mrf.mxu0
    %516 = vdwg.mxu0
    %v517 = vmax.f32 %v512, 0.0
    %v518 = vpack.c.bf16 %v517, %v517
    %v519 = vld [vmem:[#allocation7] sm:$0xf]
    %v520 = vld [vmem:[#allocation7 + $0x4] sm:$0xf]
    %v521 = vld [vmem:[#allocation7 + $0x8] sm:$0xf]
    %v522 = vld [vmem:[#allocation7 + $0xc] sm:$0xf]
    %v527 = vunpack.c.l.b16 %v519
    %v528 = vunpack.c.l.b16 %v520
    %v529 = vunpack.c.l.b16 %v521
    %v530 = vunpack.c.l.b16 %v522
    %v531 = vpack.c.b16 %v528, %v527
    %v532 = vpack.c.b16 %v530, %v529
    %v536 = vsel %vm109, %v518, 0
    %538 = vmatprep.subr.bf16.mxu0 0
    %539 = vmatpush1.bf16.msra.mxu0 0
    %540 = vmatprep.subr.bf16.mxu0 0
    %541 = vmatpush1.bf16.msra.mxu0 0
    %542 = vmatprep.subr.bf16.mxu0 0
    %543 = vmatpush1.bf16.msra.mxu0 0
    %544 = vmatprep.subr.bf16.mxu0 0
    %545 = vmatpush1.bf16.msra.mxu0 0
    %546 = vmatprep.subr.bf16.mxu0 0
    %547 = vmatpush1.bf16.msra.mxu0 0
    %548 = vmatprep.subr.bf16.mxu0 0
    %549 = vmatpush1.bf16.msra.mxu0 0
    %550 = vmatprep.subr.bf16.mxu0 0
    %551 = vmatpush1.bf16.msra.mxu0 %v532
    %552 = vmatprep.subr.bf16.mxu0 0
    %553 = vmatpush1.bf16.msra.mxu0 %v531
    %554 = vmatprep.subr.bf16.mxu0 0
    %555 = vmatpush2.bf16.msra.mxu0 0
    %556 = vmatprep.subr.bf16.mxu0 0
    %557 = vmatpush2.bf16.msra.mxu0 0
    %558 = vmatprep.subr.bf16.mxu0 0
    %559 = vmatpush2.bf16.msra.mxu0 0
    %560 = vmatprep.subr.bf16.mxu0 0
    %561 = vmatpush2.bf16.msra.mxu0 0
    %562 = vmatprep.subr.bf16.mxu0 0
    %563 = vmatpush2.bf16.msra.mxu0 0
    %564 = vmatprep.subr.bf16.mxu0 0
    %565 = vmatpush2.bf16.msra.mxu0 0
    %566 = vmatprep.subr.bf16.mxu0 0
    %567 = vmatpush2.bf16.msra.mxu0 0
    %568 = vmatprep.subr.bf16.mxu0 0
    %569 = vmatpush2.bf16.msra.mxu0 0
    %570 = vmatprep.mubr.bf16.mxu0 0
    %571 = vmatmul.mubr.bf16.gmra.mxu0 %v536
    %v572 = vpop.f32.mrf.mxu0
    %v573 = vadd.f32 0.0, %v572
    %v574 = vpop.f32.mrf.mxu0
    %v575 = vpop.f32.mrf.mxu0
    %v576 = vpop.f32.mrf.mxu0
    %577 = vdwg.mxu0
    %v578 = vadd.f32 %v456, %v573
    %v579 = vsel %vm109, %v578, 0.0
    %580 = vadd.xlane.f32.xlu0 %v579
    %v581 = vpop.xlane.xlu0 %580
    %v582 = vmul.f32 %v578, %v578
    %v583 = vsel %vm109, %v582, 0.0
    %584 = vadd.xlane.f32.xlu0 %v583
    %v585 = vpop.xlane.xlu0 %584
    %v586 = vmul.f32 %v581, 0.03125
    %v587 = vmul.f32 %v585, 0.03125
    %v588 = vmul.f32 %v586, %v586
    %v589 = vsub.f32 %v587, %v588
    %v590 = vsub.f32 %v578, %v586
    %v591 = vadd.f32 %v589, 1e-05
    %v592 = vrsqrt.pop %v591
    %v593 = vmul.f32 %v590, %v592
    %v594 = vlaneseq
    %v595 = vshrl.u32 %v594, 7
    %v596 = vsub.s32 1, %v595
    %v597 = vrot.slane %v91, %v596
    %v598 = vmul.f32 %v593, %v597
    %v599 = vpack.c.bf16 %v598, %v598
    %s600 = scalar_lea.vmem [#allocation2], 48
    %v601 = vld [vmem:[%s600] sm:$0xf]
    %v602 = vld [vmem:[%s600 + $0x4] sm:$0xf]
    %v603 = vld [vmem:[%s600 + $0x8] sm:$0xf]
    %v604 = vld [vmem:[%s600 + $0xc] sm:$0xf]
    %v609 = vunpack.c.l.b16 %v601
    %v610 = vunpack.c.l.b16 %v602
    %v611 = vunpack.c.l.b16 %v603
    %v612 = vunpack.c.l.b16 %v604
    %v613 = vpack.c.b16 %v610, %v609
    %v614 = vpack.c.b16 %v612, %v611
    %v618 = vsel %vm109, %v599, 0
    %620 = vmatprep.subr.bf16.mxu0 0
    %621 = vmatpush1.bf16.msra.mxu0 0
    %622 = vmatprep.subr.bf16.mxu0 0
    %623 = vmatpush1.bf16.msra.mxu0 0
    %624 = vmatprep.subr.bf16.mxu0 0
    %625 = vmatpush1.bf16.msra.mxu0 0
    %626 = vmatprep.subr.bf16.mxu0 0
    %627 = vmatpush1.bf16.msra.mxu0 0
    %628 = vmatprep.subr.bf16.mxu0 0
    %629 = vmatpush1.bf16.msra.mxu0 0
    %630 = vmatprep.subr.bf16.mxu0 0
    %631 = vmatpush1.bf16.msra.mxu0 0
    %632 = vmatprep.subr.bf16.mxu0 0
    %633 = vmatpush1.bf16.msra.mxu0 %v614
    %634 = vmatprep.subr.bf16.mxu0 0
    %635 = vmatpush1.bf16.msra.mxu0 %v613
    %636 = vmatprep.subr.bf16.mxu0 0
    %637 = vmatpush2.bf16.msra.mxu0 0
    %638 = vmatprep.subr.bf16.mxu0 0
    %639 = vmatpush2.bf16.msra.mxu0 0
    %640 = vmatprep.subr.bf16.mxu0 0
    %641 = vmatpush2.bf16.msra.mxu0 0
    %642 = vmatprep.subr.bf16.mxu0 0
    %643 = vmatpush2.bf16.msra.mxu0 0
    %644 = vmatprep.subr.bf16.mxu0 0
    %645 = vmatpush2.bf16.msra.mxu0 0
    %646 = vmatprep.subr.bf16.mxu0 0
    %647 = vmatpush2.bf16.msra.mxu0 0
    %648 = vmatprep.subr.bf16.mxu0 0
    %649 = vmatpush2.bf16.msra.mxu0 0
    %650 = vmatprep.subr.bf16.mxu0 0
    %651 = vmatpush2.bf16.msra.mxu0 0
    %652 = vmatprep.mubr.bf16.mxu0 0
    %653 = vmatmul.mubr.bf16.gmra.mxu0 %v618
    %v654 = vpop.f32.mrf.mxu0
    %v655 = vadd.f32 0.0, %v654
    %v656 = vpop.f32.mrf.mxu0
    %v657 = vpop.f32.mrf.mxu0
    %v658 = vpop.f32.mrf.mxu0
    %659 = vdwg.mxu0
    %s660 = scalar_lea.vmem [#allocation2], 64
    %v661 = vld [vmem:[%s660] sm:$0xf]
    %v662 = vld [vmem:[%s660 + $0x4] sm:$0xf]
    %v663 = vld [vmem:[%s660 + $0x8] sm:$0xf]
    %v664 = vld [vmem:[%s660 + $0xc] sm:$0xf]
    %v669 = vunpack.c.l.b16 %v661
    %v670 = vunpack.c.l.b16 %v662
    %v671 = vunpack.c.l.b16 %v663
    %v672 = vunpack.c.l.b16 %v664
    %v673 = vpack.c.b16 %v670, %v669
    %v674 = vpack.c.b16 %v672, %v671
    %677 = vmatprep.subr.bf16.mxu0 0
    %678 = vmatpush1.bf16.msra.mxu0 0
    %679 = vmatprep.subr.bf16.mxu0 0
    %680 = vmatpush1.bf16.msra.mxu0 0
    %681 = vmatprep.subr.bf16.mxu0 0
    %682 = vmatpush1.bf16.msra.mxu0 0
    %683 = vmatprep.subr.bf16.mxu0 0
    %684 = vmatpush1.bf16.msra.mxu0 0
    %685 = vmatprep.subr.bf16.mxu0 0
    %686 = vmatpush1.bf16.msra.mxu0 0
    %687 = vmatprep.subr.bf16.mxu0 0
    %688 = vmatpush1.bf16.msra.mxu0 0
    %689 = vmatprep.subr.bf16.mxu0 0
    %690 = vmatpush1.bf16.msra.mxu0 %v674
    %691 = vmatprep.subr.bf16.mxu0 0
    %692 = vmatpush1.bf16.msra.mxu0 %v673
    %693 = vmatprep.subr.bf16.mxu0 0
    %694 = vmatpush2.bf16.msra.mxu0 0
    %695 = vmatprep.subr.bf16.mxu0 0
    %696 = vmatpush2.bf16.msra.mxu0 0
    %697 = vmatprep.subr.bf16.mxu0 0
    %698 = vmatpush2.bf16.msra.mxu0 0
    %699 = vmatprep.subr.bf16.mxu0 0
    %700 = vmatpush2.bf16.msra.mxu0 0
    %701 = vmatprep.subr.bf16.mxu0 0
    %702 = vmatpush2.bf16.msra.mxu0 0
    %703 = vmatprep.subr.bf16.mxu0 0
    %704 = vmatpush2.bf16.msra.mxu0 0
    %705 = vmatprep.subr.bf16.mxu0 0
    %706 = vmatpush2.bf16.msra.mxu0 0
    %707 = vmatprep.subr.bf16.mxu0 0
    %708 = vmatpush2.bf16.msra.mxu0 0
    %709 = vmatprep.mubr.bf16.mxu0 0
    %710 = vmatmul.mubr.bf16.gmra.mxu0 %v618
    %v711 = vpop.f32.mrf.mxu0
    %v712 = vadd.f32 0.0, %v711
    %v713 = vpop.f32.mrf.mxu0
    %v714 = vpop.f32.mrf.mxu0
    %v715 = vpop.f32.mrf.mxu0
    %716 = vdwg.mxu0
    %s717 = scalar_lea.vmem [#allocation2], 80
    %v718 = vld [vmem:[%s717] sm:$0xf]
    %v719 = vld [vmem:[%s717 + $0x4] sm:$0xf]
    %v720 = vld [vmem:[%s717 + $0x8] sm:$0xf]
    %v721 = vld [vmem:[%s717 + $0xc] sm:$0xf]
    %v726 = vunpack.c.l.b16 %v718
    %v727 = vunpack.c.l.b16 %v719
    %v728 = vunpack.c.l.b16 %v720
    %v729 = vunpack.c.l.b16 %v721
    %v730 = vpack.c.b16 %v727, %v726
    %v731 = vpack.c.b16 %v729, %v728
    %734 = vmatprep.subr.bf16.mxu0 0
    %735 = vmatpush1.bf16.msra.mxu0 0
    %736 = vmatprep.subr.bf16.mxu0 0
    %737 = vmatpush1.bf16.msra.mxu0 0
    %738 = vmatprep.subr.bf16.mxu0 0
    %739 = vmatpush1.bf16.msra.mxu0 0
    %740 = vmatprep.subr.bf16.mxu0 0
    %741 = vmatpush1.bf16.msra.mxu0 0
    %742 = vmatprep.subr.bf16.mxu0 0
    %743 = vmatpush1.bf16.msra.mxu0 0
    %744 = vmatprep.subr.bf16.mxu0 0
    %745 = vmatpush1.bf16.msra.mxu0 0
    %746 = vmatprep.subr.bf16.mxu0 0
    %747 = vmatpush1.bf16.msra.mxu0 %v731
    %748 = vmatprep.subr.bf16.mxu0 0
    %749 = vmatpush1.bf16.msra.mxu0 %v730
    %750 = vmatprep.subr.bf16.mxu0 0
    %751 = vmatpush2.bf16.msra.mxu0 0
    %752 = vmatprep.subr.bf16.mxu0 0
    %753 = vmatpush2.bf16.msra.mxu0 0
    %754 = vmatprep.subr.bf16.mxu0 0
    %755 = vmatpush2.bf16.msra.mxu0 0
    %756 = vmatprep.subr.bf16.mxu0 0
    %757 = vmatpush2.bf16.msra.mxu0 0
    %758 = vmatprep.subr.bf16.mxu0 0
    %759 = vmatpush2.bf16.msra.mxu0 0
    %760 = vmatprep.subr.bf16.mxu0 0
    %761 = vmatpush2.bf16.msra.mxu0 0
    %762 = vmatprep.subr.bf16.mxu0 0
    %763 = vmatpush2.bf16.msra.mxu0 0
    %764 = vmatprep.subr.bf16.mxu0 0
    %765 = vmatpush2.bf16.msra.mxu0 0
    %766 = vmatprep.mubr.bf16.mxu0 0
    %767 = vmatmul.mubr.bf16.gmra.mxu0 %v618
    %v768 = vpop.f32.mrf.mxu0
    %v769 = vadd.f32 0.0, %v768
    %v770 = vpop.f32.mrf.mxu0
    %v771 = vpop.f32.mrf.mxu0
    %v772 = vpop.f32.mrf.mxu0
    %773 = vdwg.mxu0
    %v774 = vpack.c.bf16 %v655, %v655
    %v775 = vpack.c.bf16 %v712, %v712
    %v777 = vsel %vm109, %v774, 0
    %v780 = vsel %vm109, %v775, 0
    %782 = vmatprep.subr.bf16.mxu0 0
    %783 = vmatpush1.bf16.xpose.msra.mxu0 0
    %784 = vmatprep.subr.bf16.mxu0 0
    %785 = vmatpush1.bf16.xpose.msra.mxu0 0
    %786 = vmatprep.subr.bf16.mxu0 0
    %787 = vmatpush1.bf16.xpose.msra.mxu0 0
    %788 = vmatprep.subr.bf16.mxu0 0
    %789 = vmatpush1.bf16.xpose.msra.mxu0 0
    %790 = vmatprep.subr.bf16.mxu0 0
    %791 = vmatpush1.bf16.xpose.msra.mxu0 0
    %792 = vmatprep.subr.bf16.mxu0 0
    %793 = vmatpush1.bf16.xpose.msra.mxu0 0
    %794 = vmatprep.subr.bf16.mxu0 0
    %795 = vmatpush1.bf16.xpose.msra.mxu0 0
    %796 = vmatprep.subr.bf16.mxu0 0
    %797 = vmatpush1.bf16.xpose.msra.mxu0 %v780
    %798 = vmatprep.subr.bf16.mxu0 0
    %799 = vmatpush2.bf16.xpose.msra.mxu0 0
    %800 = vmatprep.subr.bf16.mxu0 0
    %801 = vmatpush2.bf16.xpose.msra.mxu0 0
    %802 = vmatprep.subr.bf16.mxu0 0
    %803 = vmatpush2.bf16.xpose.msra.mxu0 0
    %804 = vmatprep.subr.bf16.mxu0 0
    %805 = vmatpush2.bf16.xpose.msra.mxu0 0
    %806 = vmatprep.subr.bf16.mxu0 0
    %807 = vmatpush2.bf16.xpose.msra.mxu0 0
    %808 = vmatprep.subr.bf16.mxu0 0
    %809 = vmatpush2.bf16.xpose.msra.mxu0 0
    %810 = vmatprep.subr.bf16.mxu0 0
    %811 = vmatpush2.bf16.xpose.msra.mxu0 0
    %812 = vmatprep.subr.bf16.mxu0 0
    %813 = vmatpush2.bf16.xpose.msra.mxu0 0
    %814 = vmatprep.mubr.bf16.mxu0 0
    %815 = vmatmul.mubr.bf16.gmra.mxu0 %v777
    %v816 = vpop.f32.mrf.mxu0
    %v817 = vadd.f32 0.0, %v816
    %v818 = vpop.f32.mrf.mxu0
    %v819 = vpop.f32.mrf.mxu0
    %v820 = vpop.f32.mrf.mxu0
    %821 = vdwg.mxu0
    %v822 = vsel %vm315, %v817, -inf
    %823 = vmax.xlane.f32.xlu0 %v822
    %v824 = vpop.xlane.xlu0 %823
    %v825 = vsub.f32 %v817, %v824
    %v826 = vmul.f32 %v825, 1.442695
    %v827 = vpow.pop %v826
    %v828 = vsel %vm315, %v827, 0.0
    %829 = vadd.xlane.f32.xlu0 %v828
    %v830 = vpop.xlane.xlu0 %829
    %v831 = vrcp.pop %v830
    %v832 = vmul.f32 %v827, %v831
    %v833 = vpack.c.bf16 %v832, %v832
    %v834 = vpack.c.bf16 %v769, %v769
    %v836 = vsel %vm315, %v833, 0
    %v839 = vsel %vm332, %v834, 0
    %841 = vmatprep.subr.bf16.mxu0 0
    %842 = vmatpush1.bf16.msra.mxu0 0
    %843 = vmatprep.subr.bf16.mxu0 0
    %844 = vmatpush1.bf16.msra.mxu0 0
    %845 = vmatprep.subr.bf16.mxu0 0
    %846 = vmatpush1.bf16.msra.mxu0 0
    %847 = vmatprep.subr.bf16.mxu0 0
    %848 = vmatpush1.bf16.msra.mxu0 0
    %849 = vmatprep.subr.bf16.mxu0 0
    %850 = vmatpush1.bf16.msra.mxu0 0
    %851 = vmatprep.subr.bf16.mxu0 0
    %852 = vmatpush1.bf16.msra.mxu0 0
    %853 = vmatprep.subr.bf16.mxu0 0
    %854 = vmatpush1.bf16.msra.mxu0 0
    %855 = vmatprep.subr.bf16.mxu0 0
    %856 = vmatpush1.bf16.msra.mxu0 %v839
    %857 = vmatprep.subr.bf16.mxu0 0
    %858 = vmatpush2.bf16.msra.mxu0 0
    %859 = vmatprep.subr.bf16.mxu0 0
    %860 = vmatpush2.bf16.msra.mxu0 0
    %861 = vmatprep.subr.bf16.mxu0 0
    %862 = vmatpush2.bf16.msra.mxu0 0
    %863 = vmatprep.subr.bf16.mxu0 0
    %864 = vmatpush2.bf16.msra.mxu0 0
    %865 = vmatprep.subr.bf16.mxu0 0
    %866 = vmatpush2.bf16.msra.mxu0 0
    %867 = vmatprep.subr.bf16.mxu0 0
    %868 = vmatpush2.bf16.msra.mxu0 0
    %869 = vmatprep.subr.bf16.mxu0 0
    %870 = vmatpush2.bf16.msra.mxu0 0
    %871 = vmatprep.subr.bf16.mxu0 0
    %872 = vmatpush2.bf16.msra.mxu0 0
    %873 = vmatprep.mubr.bf16.mxu0 0
    %874 = vmatmul.mubr.bf16.gmra.mxu0 %v836
    %v875 = vpop.f32.mrf.mxu0
    %v876 = vadd.f32 0.0, %v875
    %v877 = vpop.f32.mrf.mxu0
    %v878 = vpop.f32.mrf.mxu0
    %v879 = vpop.f32.mrf.mxu0
    %880 = vdwg.mxu0
    %v881 = vpack.c.bf16 %v876, %v876
    %s882 = scalar_lea.vmem [#allocation4], 16
    %v883 = vld [vmem:[%s882] sm:$0xf]
    %v884 = vld [vmem:[%s882 + $0x4] sm:$0xf]
    %v885 = vld [vmem:[%s882 + $0x8] sm:$0xf]
    %v886 = vld [vmem:[%s882 + $0xc] sm:$0xf]
    %v891 = vunpack.c.l.b16 %v883
    %v892 = vunpack.c.l.b16 %v884
    %v893 = vunpack.c.l.b16 %v885
    %v894 = vunpack.c.l.b16 %v886
    %v895 = vpack.c.b16 %v892, %v891
    %v896 = vpack.c.b16 %v894, %v893
    %v900 = vsel %vm109, %v881, 0
    %902 = vmatprep.subr.bf16.mxu0 0
    %903 = vmatpush1.bf16.msra.mxu0 0
    %904 = vmatprep.subr.bf16.mxu0 0
    %905 = vmatpush1.bf16.msra.mxu0 0
    %906 = vmatprep.subr.bf16.mxu0 0
    %907 = vmatpush1.bf16.msra.mxu0 0
    %908 = vmatprep.subr.bf16.mxu0 0
    %909 = vmatpush1.bf16.msra.mxu0 0
    %910 = vmatprep.subr.bf16.mxu0 0
    %911 = vmatpush1.bf16.msra.mxu0 0
    %912 = vmatprep.subr.bf16.mxu0 0
    %913 = vmatpush1.bf16.msra.mxu0 0
    %914 = vmatprep.subr.bf16.mxu0 0
    %915 = vmatpush1.bf16.msra.mxu0 %v896
    %916 = vmatprep.subr.bf16.mxu0 0
    %917 = vmatpush1.bf16.msra.mxu0 %v895
    %918 = vmatprep.subr.bf16.mxu0 0
    %919 = vmatpush2.bf16.msra.mxu0 0
    %920 = vmatprep.subr.bf16.mxu0 0
    %921 = vmatpush2.bf16.msra.mxu0 0
    %922 = vmatprep.subr.bf16.mxu0 0
    %923 = vmatpush2.bf16.msra.mxu0 0
    %924 = vmatprep.subr.bf16.mxu0 0
    %925 = vmatpush2.bf16.msra.mxu0 0
    %926 = vmatprep.subr.bf16.mxu0 0
    %927 = vmatpush2.bf16.msra.mxu0 0
    %928 = vmatprep.subr.bf16.mxu0 0
    %929 = vmatpush2.bf16.msra.mxu0 0
    %930 = vmatprep.subr.bf16.mxu0 0
    %931 = vmatpush2.bf16.msra.mxu0 0
    %932 = vmatprep.subr.bf16.mxu0 0
    %933 = vmatpush2.bf16.msra.mxu0 0
    %934 = vmatprep.mubr.bf16.mxu0 0
    %935 = vmatmul.mubr.bf16.gmra.mxu0 %v900
    %v936 = vpop.f32.mrf.mxu0
    %v937 = vadd.f32 0.0, %v936
    %v938 = vpop.f32.mrf.mxu0
    %v939 = vpop.f32.mrf.mxu0
    %v940 = vpop.f32.mrf.mxu0
    %941 = vdwg.mxu0
    %v942 = vadd.f32 %v598, %v937
    %v943 = vsel %vm109, %v942, 0.0
    %944 = vadd.xlane.f32.xlu0 %v943
    %v945 = vpop.xlane.xlu0 %944
    %v946 = vmul.f32 %v942, %v942
    %v947 = vsel %vm109, %v946, 0.0
    %948 = vadd.xlane.f32.xlu0 %v947
    %v949 = vpop.xlane.xlu0 %948
    %v950 = vmul.f32 %v945, 0.03125
    %v951 = vmul.f32 %v949, 0.03125
    %v952 = vmul.f32 %v950, %v950
    %v953 = vsub.f32 %v951, %v952
    %v954 = vsub.f32 %v942, %v950
    %v955 = vadd.f32 %v953, 1e-05
    %v956 = vrsqrt.pop %v955
    %v957 = vmul.f32 %v954, %v956
    %v958 = vlaneseq
    %v959 = vshrl.u32 %v958, 7
    %v960 = vsub.s32 2, %v959
    %v961 = vrot.slane %v91, %v960
    %v962 = vmul.f32 %v957, %v961
    %v963 = vpack.c.bf16 %v962, %v962
    %s964 = scalar_lea.vmem [#allocation6], 16
    %v965 = vld [vmem:[%s964] sm:$0xf]
    %v966 = vld [vmem:[%s964 + $0x4] sm:$0xf]
    %v967 = vld [vmem:[%s964 + $0x8] sm:$0xf]
    %v968 = vld [vmem:[%s964 + $0xc] sm:$0xf]
    %v973 = vunpack.c.l.b16 %v965
    %v974 = vunpack.c.l.b16 %v966
    %v975 = vunpack.c.l.b16 %v967
    %v976 = vunpack.c.l.b16 %v968
    %v977 = vpack.c.b16 %v974, %v973
    %v978 = vpack.c.b16 %v976, %v975
    %v982 = vsel %vm109, %v963, 0
    %984 = vmatprep.subr.bf16.mxu0 0
    %985 = vmatpush1.bf16.msra.mxu0 0
    %986 = vmatprep.subr.bf16.mxu0 0
    %987 = vmatpush1.bf16.msra.mxu0 0
    %988 = vmatprep.subr.bf16.mxu0 0
    %989 = vmatpush1.bf16.msra.mxu0 0
    %990 = vmatprep.subr.bf16.mxu0 0
    %991 = vmatpush1.bf16.msra.mxu0 0
    %992 = vmatprep.subr.bf16.mxu0 0
    %993 = vmatpush1.bf16.msra.mxu0 0
    %994 = vmatprep.subr.bf16.mxu0 0
    %995 = vmatpush1.bf16.msra.mxu0 0
    %996 = vmatprep.subr.bf16.mxu0 0
    %997 = vmatpush1.bf16.msra.mxu0 %v978
    %998 = vmatprep.subr.bf16.mxu0 0
    %999 = vmatpush1.bf16.msra.mxu0 %v977
    %1000 = vmatprep.subr.bf16.mxu0 0
    %1001 = vmatpush2.bf16.msra.mxu0 0
    %1002 = vmatprep.subr.bf16.mxu0 0
    %1003 = vmatpush2.bf16.msra.mxu0 0
    %1004 = vmatprep.subr.bf16.mxu0 0
    %1005 = vmatpush2.bf16.msra.mxu0 0
    %1006 = vmatprep.subr.bf16.mxu0 0
    %1007 = vmatpush2.bf16.msra.mxu0 0
    %1008 = vmatprep.subr.bf16.mxu0 0
    %1009 = vmatpush2.bf16.msra.mxu0 0
    %1010 = vmatprep.subr.bf16.mxu0 0
    %1011 = vmatpush2.bf16.msra.mxu0 0
    %1012 = vmatprep.subr.bf16.mxu0 0
    %1013 = vmatpush2.bf16.msra.mxu0 0
    %1014 = vmatprep.subr.bf16.mxu0 0
    %1015 = vmatpush2.bf16.msra.mxu0 0
    %1016 = vmatprep.mubr.bf16.mxu0 0
    %1017 = vmatmul.mubr.bf16.gmra.mxu0 %v982
    %v1018 = vpop.f32.mrf.mxu0
    %v1019 = vadd.f32 0.0, %v1018
    %v1020 = vpop.f32.mrf.mxu0
    %v1021 = vpop.f32.mrf.mxu0
    %v1022 = vpop.f32.mrf.mxu0
    %1023 = vdwg.mxu0
    %v1024 = vmax.f32 %v1019, 0.0
    %v1025 = vpack.c.bf16 %v1024, %v1024
    %s1026 = scalar_lea.vmem [#allocation7], 16
    %v1027 = vld [vmem:[%s1026] sm:$0xf]
    %v1028 = vld [vmem:[%s1026 + $0x4] sm:$0xf]
    %v1029 = vld [vmem:[%s1026 + $0x8] sm:$0xf]
    %v1030 = vld [vmem:[%s1026 + $0xc] sm:$0xf]
    %v1035 = vunpack.c.l.b16 %v1027
    %v1036 = vunpack.c.l.b16 %v1028
    %v1037 = vunpack.c.l.b16 %v1029
    %v1038 = vunpack.c.l.b16 %v1030
    %v1039 = vpack.c.b16 %v1036, %v1035
    %v1040 = vpack.c.b16 %v1038, %v1037
    %v1044 = vsel %vm109, %v1025, 0
    %1046 = vmatprep.subr.bf16.mxu0 0
    %1047 = vmatpush1.bf16.msra.mxu0 0
    %1048 = vmatprep.subr.bf16.mxu0 0
    %1049 = vmatpush1.bf16.msra.mxu0 0
    %1050 = vmatprep.subr.bf16.mxu0 0
    %1051 = vmatpush1.bf16.msra.mxu0 0
    %1052 = vmatprep.subr.bf16.mxu0 0
    %1053 = vmatpush1.bf16.msra.mxu0 0
    %1054 = vmatprep.subr.bf16.mxu0 0
    %1055 = vmatpush1.bf16.msra.mxu0 0
    %1056 = vmatprep.subr.bf16.mxu0 0
    %1057 = vmatpush1.bf16.msra.mxu0 0
    %1058 = vmatprep.subr.bf16.mxu0 0
    %1059 = vmatpush1.bf16.msra.mxu0 %v1040
    %1060 = vmatprep.subr.bf16.mxu0 0
    %1061 = vmatpush1.bf16.msra.mxu0 %v1039
    %1062 = vmatprep.subr.bf16.mxu0 0
    %1063 = vmatpush2.bf16.msra.mxu0 0
    %1064 = vmatprep.subr.bf16.mxu0 0
    %1065 = vmatpush2.bf16.msra.mxu0 0
    %1066 = vmatprep.subr.bf16.mxu0 0
    %1067 = vmatpush2.bf16.msra.mxu0 0
    %1068 = vmatprep.subr.bf16.mxu0 0
    %1069 = vmatpush2.bf16.msra.mxu0 0
    %1070 = vmatprep.subr.bf16.mxu0 0
    %1071 = vmatpush2.bf16.msra.mxu0 0
    %1072 = vmatprep.subr.bf16.mxu0 0
    %1073 = vmatpush2.bf16.msra.mxu0 0
    %1074 = vmatprep.subr.bf16.mxu0 0
    %1075 = vmatpush2.bf16.msra.mxu0 0
    %1076 = vmatprep.subr.bf16.mxu0 0
    %1077 = vmatpush2.bf16.msra.mxu0 0
    %1078 = vmatprep.mubr.bf16.mxu0 0
    %1079 = vmatmul.mubr.bf16.gmra.mxu0 %v1044
    %v1080 = vpop.f32.mrf.mxu0
    %v1081 = vadd.f32 0.0, %v1080
    %v1082 = vpop.f32.mrf.mxu0
    %v1083 = vpop.f32.mrf.mxu0
    %v1084 = vpop.f32.mrf.mxu0
    %1085 = vdwg.mxu0
    %v1086 = vadd.f32 %v962, %v1081
    %v1087 = vsel %vm109, %v1086, 0.0
    %1088 = vadd.xlane.f32.xlu0 %v1087
    %v1089 = vpop.xlane.xlu0 %1088
    %v1090 = vmul.f32 %v1086, %v1086
    %v1091 = vsel %vm109, %v1090, 0.0
    %1092 = vadd.xlane.f32.xlu0 %v1091
    %v1093 = vpop.xlane.xlu0 %1092
    %v1094 = vmul.f32 %v1089, 0.03125
    %v1095 = vmul.f32 %v1093, 0.03125
    %v1096 = vmul.f32 %v1094, %v1094
    %v1097 = vsub.f32 %v1095, %v1096
    %v1098 = vsub.f32 %v1086, %v1094
    %v1099 = vadd.f32 %v1097, 1e-05
    %v1100 = vrsqrt.pop %v1099
    %v1101 = vmul.f32 %v1098, %v1100
    %v1102 = vlaneseq
    %v1103 = vshrl.u32 %v1102, 7
    %v1104 = vsub.s32 3, %v1103
    %v1105 = vrot.slane %v91, %v1104
    %v1106 = vmul.f32 %v1101, %v1105
    %v1107 = vpack.c.bf16 %v1106, %v1106
    %s1108 = scalar_lea.vmem [#allocation2], 96
    %v1109 = vld [vmem:[%s1108] sm:$0xf]
    %v1110 = vld [vmem:[%s1108 + $0x4] sm:$0xf]
    %v1111 = vld [vmem:[%s1108 + $0x8] sm:$0xf]
    %v1112 = vld [vmem:[%s1108 + $0xc] sm:$0xf]
    %v1117 = vunpack.c.l.b16 %v1109
    %v1118 = vunpack.c.l.b16 %v1110
    %v1119 = vunpack.c.l.b16 %v1111
    %v1120 = vunpack.c.l.b16 %v1112
    %v1121 = vpack.c.b16 %v1118, %v1117
    %v1122 = vpack.c.b16 %v1120, %v1119
    %v1126 = vsel %vm109, %v1107, 0
    %1128 = vmatprep.subr.bf16.mxu0 0
    %1129 = vmatpush1.bf16.msra.mxu0 0
    %1130 = vmatprep.subr.bf16.mxu0 0
    %1131 = vmatpush1.bf16.msra.mxu0 0
    %1132 = vmatprep.subr.bf16.mxu0 0
    %1133 = vmatpush1.bf16.msra.mxu0 0
    %1134 = vmatprep.subr.bf16.mxu0 0
    %1135 = vmatpush1.bf16.msra.mxu0 0
    %1136 = vmatprep.subr.bf16.mxu0 0
    %1137 = vmatpush1.bf16.msra.mxu0 0
    %1138 = vmatprep.subr.bf16.mxu0 0
    %1139 = vmatpush1.bf16.msra.mxu0 0
    %1140 = vmatprep.subr.bf16.mxu0 0
    %1141 = vmatpush1.bf16.msra.mxu0 %v1122
    %1142 = vmatprep.subr.bf16.mxu0 0
    %1143 = vmatpush1.bf16.msra.mxu0 %v1121
    %1144 = vmatprep.subr.bf16.mxu0 0
    %1145 = vmatpush2.bf16.msra.mxu0 0
    %1146 = vmatprep.subr.bf16.mxu0 0
    %1147 = vmatpush2.bf16.msra.mxu0 0
    %1148 = vmatprep.subr.bf16.mxu0 0
    %1149 = vmatpush2.bf16.msra.mxu0 0
    %1150 = vmatprep.subr.bf16.mxu0 0
    %1151 = vmatpush2.bf16.msra.mxu0 0
    %1152 = vmatprep.subr.bf16.mxu0 0
    %1153 = vmatpush2.bf16.msra.mxu0 0
    %1154 = vmatprep.subr.bf16.mxu0 0
    %1155 = vmatpush2.bf16.msra.mxu0 0
    %1156 = vmatprep.subr.bf16.mxu0 0
    %1157 = vmatpush2.bf16.msra.mxu0 0
    %1158 = vmatprep.subr.bf16.mxu0 0
    %1159 = vmatpush2.bf16.msra.mxu0 0
    %1160 = vmatprep.mubr.bf16.mxu0 0
    %1161 = vmatmul.mubr.bf16.gmra.mxu0 %v1126
    %v1162 = vpop.f32.mrf.mxu0
    %v1163 = vadd.f32 0.0, %v1162
    %v1164 = vpop.f32.mrf.mxu0
    %v1165 = vpop.f32.mrf.mxu0
    %v1166 = vpop.f32.mrf.mxu0
    %1167 = vdwg.mxu0
    %s1168 = scalar_lea.vmem [#allocation2], 112
    %v1169 = vld [vmem:[%s1168] sm:$0xf]
    %v1170 = vld [vmem:[%s1168 + $0x4] sm:$0xf]
    %v1171 = vld [vmem:[%s1168 + $0x8] sm:$0xf]
    %v1172 = vld [vmem:[%s1168 + $0xc] sm:$0xf]
    %v1177 = vunpack.c.l.b16 %v1169
    %v1178 = vunpack.c.l.b16 %v1170
    %v1179 = vunpack.c.l.b16 %v1171
    %v1180 = vunpack.c.l.b16 %v1172
    %v1181 = vpack.c.b16 %v1178, %v1177
    %v1182 = vpack.c.b16 %v1180, %v1179
    %1185 = vmatprep.subr.bf16.mxu0 0
    %1186 = vmatpush1.bf16.msra.mxu0 0
    %1187 = vmatprep.subr.bf16.mxu0 0
    %1188 = vmatpush1.bf16.msra.mxu0 0
    %1189 = vmatprep.subr.bf16.mxu0 0
    %1190 = vmatpush1.bf16.msra.mxu0 0
    %1191 = vmatprep.subr.bf16.mxu0 0
    %1192 = vmatpush1.bf16.msra.mxu0 0
    %1193 = vmatprep.subr.bf16.mxu0 0
    %1194 = vmatpush1.bf16.msra.mxu0 0
    %1195 = vmatprep.subr.bf16.mxu0 0
    %1196 = vmatpush1.bf16.msra.mxu0 0
    %1197 = vmatprep.subr.bf16.mxu0 0
    %1198 = vmatpush1.bf16.msra.mxu0 %v1182
    %1199 = vmatprep.subr.bf16.mxu0 0
    %1200 = vmatpush1.bf16.msra.mxu0 %v1181
    %1201 = vmatprep.subr.bf16.mxu0 0
    %1202 = vmatpush2.bf16.msra.mxu0 0
    %1203 = vmatprep.subr.bf16.mxu0 0
    %1204 = vmatpush2.bf16.msra.mxu0 0
    %1205 = vmatprep.subr.bf16.mxu0 0
    %1206 = vmatpush2.bf16.msra.mxu0 0
    %1207 = vmatprep.subr.bf16.mxu0 0
    %1208 = vmatpush2.bf16.msra.mxu0 0
    %1209 = vmatprep.subr.bf16.mxu0 0
    %1210 = vmatpush2.bf16.msra.mxu0 0
    %1211 = vmatprep.subr.bf16.mxu0 0
    %1212 = vmatpush2.bf16.msra.mxu0 0
    %1213 = vmatprep.subr.bf16.mxu0 0
    %1214 = vmatpush2.bf16.msra.mxu0 0
    %1215 = vmatprep.subr.bf16.mxu0 0
    %1216 = vmatpush2.bf16.msra.mxu0 0
    %1217 = vmatprep.mubr.bf16.mxu0 0
    %1218 = vmatmul.mubr.bf16.gmra.mxu0 %v1126
    %v1219 = vpop.f32.mrf.mxu0
    %v1220 = vadd.f32 0.0, %v1219
    %v1221 = vpop.f32.mrf.mxu0
    %v1222 = vpop.f32.mrf.mxu0
    %v1223 = vpop.f32.mrf.mxu0
    %1224 = vdwg.mxu0
    %s1225 = scalar_lea.vmem [#allocation2], 128
    %v1226 = vld [vmem:[%s1225] sm:$0xf]
    %v1227 = vld [vmem:[%s1225 + $0x4] sm:$0xf]
    %v1228 = vld [vmem:[%s1225 + $0x8] sm:$0xf]
    %v1229 = vld [vmem:[%s1225 + $0xc] sm:$0xf]
    %v1234 = vunpack.c.l.b16 %v1226
    %v1235 = vunpack.c.l.b16 %v1227
    %v1236 = vunpack.c.l.b16 %v1228
    %v1237 = vunpack.c.l.b16 %v1229
    %v1238 = vpack.c.b16 %v1235, %v1234
    %v1239 = vpack.c.b16 %v1237, %v1236
    %1242 = vmatprep.subr.bf16.mxu0 0
    %1243 = vmatpush1.bf16.msra.mxu0 0
    %1244 = vmatprep.subr.bf16.mxu0 0
    %1245 = vmatpush1.bf16.msra.mxu0 0
    %1246 = vmatprep.subr.bf16.mxu0 0
    %1247 = vmatpush1.bf16.msra.mxu0 0
    %1248 = vmatprep.subr.bf16.mxu0 0
    %1249 = vmatpush1.bf16.msra.mxu0 0
    %1250 = vmatprep.subr.bf16.mxu0 0
    %1251 = vmatpush1.bf16.msra.mxu0 0
    %1252 = vmatprep.subr.bf16.mxu0 0
    %1253 = vmatpush1.bf16.msra.mxu0 0
    %1254 = vmatprep.subr.bf16.mxu0 0
    %1255 = vmatpush1.bf16.msra.mxu0 %v1239
    %1256 = vmatprep.subr.bf16.mxu0 0
    %1257 = vmatpush1.bf16.msra.mxu0 %v1238
    %1258 = vmatprep.subr.bf16.mxu0 0
    %1259 = vmatpush2.bf16.msra.mxu0 0
    %1260 = vmatprep.subr.bf16.mxu0 0
    %1261 = vmatpush2.bf16.msra.mxu0 0
    %1262 = vmatprep.subr.bf16.mxu0 0
    %1263 = vmatpush2.bf16.msra.mxu0 0
    %1264 = vmatprep.subr.bf16.mxu0 0
    %1265 = vmatpush2.bf16.msra.mxu0 0
    %1266 = vmatprep.subr.bf16.mxu0 0
    %1267 = vmatpush2.bf16.msra.mxu0 0
    %1268 = vmatprep.subr.bf16.mxu0 0
    %1269 = vmatpush2.bf16.msra.mxu0 0
    %1270 = vmatprep.subr.bf16.mxu0 0
    %1271 = vmatpush2.bf16.msra.mxu0 0
    %1272 = vmatprep.subr.bf16.mxu0 0
    %1273 = vmatpush2.bf16.msra.mxu0 0
    %1274 = vmatprep.mubr.bf16.mxu0 0
    %1275 = vmatmul.mubr.bf16.gmra.mxu0 %v1126
    %v1276 = vpop.f32.mrf.mxu0
    %v1277 = vadd.f32 0.0, %v1276
    %v1278 = vpop.f32.mrf.mxu0
    %v1279 = vpop.f32.mrf.mxu0
    %v1280 = vpop.f32.mrf.mxu0
    %1281 = vdwg.mxu0
    %v1282 = vpack.c.bf16 %v1163, %v1163
    %v1283 = vpack.c.bf16 %v1220, %v1220
    %v1285 = vsel %vm109, %v1282, 0
    %v1288 = vsel %vm109, %v1283, 0
    %1290 = vmatprep.subr.bf16.mxu0 0
    %1291 = vmatpush1.bf16.xpose.msra.mxu0 0
    %1292 = vmatprep.subr.bf16.mxu0 0
    %1293 = vmatpush1.bf16.xpose.msra.mxu0 0
    %1294 = vmatprep.subr.bf16.mxu0 0
    %1295 = vmatpush1.bf16.xpose.msra.mxu0 0
    %1296 = vmatprep.subr.bf16.mxu0 0
    %1297 = vmatpush1.bf16.xpose.msra.mxu0 0
    %1298 = vmatprep.subr.bf16.mxu0 0
    %1299 = vmatpush1.bf16.xpose.msra.mxu0 0
    %1300 = vmatprep.subr.bf16.mxu0 0
    %1301 = vmatpush1.bf16.xpose.msra.mxu0 0
    %1302 = vmatprep.subr.bf16.mxu0 0
    %1303 = vmatpush1.bf16.xpose.msra.mxu0 0
    %1304 = vmatprep.subr.bf16.mxu0 0
    %1305 = vmatpush1.bf16.xpose.msra.mxu0 %v1288
    %1306 = vmatprep.subr.bf16.mxu0 0
    %1307 = vmatpush2.bf16.xpose.msra.mxu0 0
    %1308 = vmatprep.subr.bf16.mxu0 0
    %1309 = vmatpush2.bf16.xpose.msra.mxu0 0
    %1310 = vmatprep.subr.bf16.mxu0 0
    %1311 = vmatpush2.bf16.xpose.msra.mxu0 0
    %1312 = vmatprep.subr.bf16.mxu0 0
    %1313 = vmatpush2.bf16.xpose.msra.mxu0 0
    %1314 = vmatprep.subr.bf16.mxu0 0
    %1315 = vmatpush2.bf16.xpose.msra.mxu0 0
    %1316 = vmatprep.subr.bf16.mxu0 0
    %1317 = vmatpush2.bf16.xpose.msra.mxu0 0
    %1318 = vmatprep.subr.bf16.mxu0 0
    %1319 = vmatpush2.bf16.xpose.msra.mxu0 0
    %1320 = vmatprep.subr.bf16.mxu0 0
    %1321 = vmatpush2.bf16.xpose.msra.mxu0 0
    %1322 = vmatprep.mubr.bf16.mxu0 0
    %1323 = vmatmul.mubr.bf16.gmra.mxu0 %v1285
    %v1324 = vpop.f32.mrf.mxu0
    %v1325 = vadd.f32 0.0, %v1324
    %v1326 = vpop.f32.mrf.mxu0
    %v1327 = vpop.f32.mrf.mxu0
    %v1328 = vpop.f32.mrf.mxu0
    %1329 = vdwg.mxu0
    %v1330 = vsel %vm315, %v1325, -inf
    %1331 = vmax.xlane.f32.xlu0 %v1330
    %v1332 = vpop.xlane.xlu0 %1331
    %v1333 = vsub.f32 %v1325, %v1332
    %v1334 = vmul.f32 %v1333, 1.442695
    %v1335 = vpow.pop %v1334
    %v1336 = vsel %vm315, %v1335, 0.0
    %1337 = vadd.xlane.f32.xlu0 %v1336
    %v1338 = vpop.xlane.xlu0 %1337
    %v1339 = vrcp.pop %v1338
    %v1340 = vmul.f32 %v1335, %v1339
    %v1341 = vpack.c.bf16 %v1340, %v1340
    %v1342 = vpack.c.bf16 %v1277, %v1277
    %v1344 = vsel %vm315, %v1341, 0
    %v1347 = vsel %vm332, %v1342, 0
    %1349 = vmatprep.subr.bf16.mxu0 0
    %1350 = vmatpush1.bf16.msra.mxu0 0
    %1351 = vmatprep.subr.bf16.mxu0 0
    %1352 = vmatpush1.bf16.msra.mxu0 0
    %1353 = vmatprep.subr.bf16.mxu0 0
    %1354 = vmatpush1.bf16.msra.mxu0 0
    %1355 = vmatprep.subr.bf16.mxu0 0
    %1356 = vmatpush1.bf16.msra.mxu0 0
    %1357 = vmatprep.subr.bf16.mxu0 0
    %1358 = vmatpush1.bf16.msra.mxu0 0
    %1359 = vmatprep.subr.bf16.mxu0 0
    %1360 = vmatpush1.bf16.msra.mxu0 0
    %1361 = vmatprep.subr.bf16.mxu0 0
    %1362 = vmatpush1.bf16.msra.mxu0 0
    %1363 = vmatprep.subr.bf16.mxu0 0
    %1364 = vmatpush1.bf16.msra.mxu0 %v1347
    %1365 = vmatprep.subr.bf16.mxu0 0
    %1366 = vmatpush2.bf16.msra.mxu0 0
    %1367 = vmatprep.subr.bf16.mxu0 0
    %1368 = vmatpush2.bf16.msra.mxu0 0
    %1369 = vmatprep.subr.bf16.mxu0 0
    %1370 = vmatpush2.bf16.msra.mxu0 0
    %1371 = vmatprep.subr.bf16.mxu0 0
    %1372 = vmatpush2.bf16.msra.mxu0 0
    %1373 = vmatprep.subr.bf16.mxu0 0
    %1374 = vmatpush2.bf16.msra.mxu0 0
    %1375 = vmatprep.subr.bf16.mxu0 0
    %1376 = vmatpush2.bf16.msra.mxu0 0
    %1377 = vmatprep.subr.bf16.mxu0 0
    %1378 = vmatpush2.bf16.msra.mxu0 0
    %1379 = vmatprep.subr.bf16.mxu0 0
    %1380 = vmatpush2.bf16.msra.mxu0 0
    %1381 = vmatprep.mubr.bf16.mxu0 0
    %1382 = vmatmul.mubr.bf16.gmra.mxu0 %v1344
    %v1383 = vpop.f32.mrf.mxu0
    %v1384 = vadd.f32 0.0, %v1383
    %v1385 = vpop.f32.mrf.mxu0
    %v1386 = vpop.f32.mrf.mxu0
    %v1387 = vpop.f32.mrf.mxu0
    %1388 = vdwg.mxu0
    %v1389 = vpack.c.bf16 %v1384, %v1384
    %s1390 = scalar_lea.vmem [#allocation4], 32
    %v1391 = vld [vmem:[%s1390] sm:$0xf]
    %v1392 = vld [vmem:[%s1390 + $0x4] sm:$0xf]
    %v1393 = vld [vmem:[%s1390 + $0x8] sm:$0xf]
    %v1394 = vld [vmem:[%s1390 + $0xc] sm:$0xf]
    %v1399 = vunpack.c.l.b16 %v1391
    %v1400 = vunpack.c.l.b16 %v1392
    %v1401 = vunpack.c.l.b16 %v1393
    %v1402 = vunpack.c.l.b16 %v1394
    %v1403 = vpack.c.b16 %v1400, %v1399
    %v1404 = vpack.c.b16 %v1402, %v1401
    %v1408 = vsel %vm109, %v1389, 0
    %1410 = vmatprep.subr.bf16.mxu0 0
    %1411 = vmatpush1.bf16.msra.mxu0 0
    %1412 = vmatprep.subr.bf16.mxu0 0
    %1413 = vmatpush1.bf16.msra.mxu0 0
    %1414 = vmatprep.subr.bf16.mxu0 0
    %1415 = vmatpush1.bf16.msra.mxu0 0
    %1416 = vmatprep.subr.bf16.mxu0 0
    %1417 = vmatpush1.bf16.msra.mxu0 0
    %1418 = vmatprep.subr.bf16.mxu0 0
    %1419 = vmatpush1.bf16.msra.mxu0 0
    %1420 = vmatprep.subr.bf16.mxu0 0
    %1421 = vmatpush1.bf16.msra.mxu0 0
    %1422 = vmatprep.subr.bf16.mxu0 0
    %1423 = vmatpush1.bf16.msra.mxu0 %v1404
    %1424 = vmatprep.subr.bf16.mxu0 0
    %1425 = vmatpush1.bf16.msra.mxu0 %v1403
    %1426 = vmatprep.subr.bf16.mxu0 0
    %1427 = vmatpush2.bf16.msra.mxu0 0
    %1428 = vmatprep.subr.bf16.mxu0 0
    %1429 = vmatpush2.bf16.msra.mxu0 0
    %1430 = vmatprep.subr.bf16.mxu0 0
    %1431 = vmatpush2.bf16.msra.mxu0 0
    %1432 = vmatprep.subr.bf16.mxu0 0
    %1433 = vmatpush2.bf16.msra.mxu0 0
    %1434 = vmatprep.subr.bf16.mxu0 0
    %1435 = vmatpush2.bf16.msra.mxu0 0
    %1436 = vmatprep.subr.bf16.mxu0 0
    %1437 = vmatpush2.bf16.msra.mxu0 0
    %1438 = vmatprep.subr.bf16.mxu0 0
    %1439 = vmatpush2.bf16.msra.mxu0 0
    %1440 = vmatprep.subr.bf16.mxu0 0
    %1441 = vmatpush2.bf16.msra.mxu0 0
    %1442 = vmatprep.mubr.bf16.mxu0 0
    %1443 = vmatmul.mubr.bf16.gmra.mxu0 %v1408
    %v1444 = vpop.f32.mrf.mxu0
    %v1445 = vadd.f32 0.0, %v1444
    %v1446 = vpop.f32.mrf.mxu0
    %v1447 = vpop.f32.mrf.mxu0
    %v1448 = vpop.f32.mrf.mxu0
    %1449 = vdwg.mxu0
    %v1450 = vadd.f32 %v1106, %v1445
    %v1451 = vsel %vm109, %v1450, 0.0
    %1452 = vadd.xlane.f32.xlu0 %v1451
    %v1453 = vpop.xlane.xlu0 %1452
    %v1454 = vmul.f32 %v1450, %v1450
    %v1455 = vsel %vm109, %v1454, 0.0
    %1456 = vadd.xlane.f32.xlu0 %v1455
    %v1457 = vpop.xlane.xlu0 %1456
    %v1458 = vmul.f32 %v1453, 0.03125
    %v1459 = vmul.f32 %v1457, 0.03125
    %v1460 = vmul.f32 %v1458, %v1458
    %v1461 = vsub.f32 %v1459, %v1460
    %v1462 = vsub.f32 %v1450, %v1458
    %v1463 = vadd.f32 %v1461, 1e-05
    %v1464 = vrsqrt.pop %v1463
    %v1465 = vmul.f32 %v1462, %v1464
    %v1466 = vlaneseq
    %v1467 = vshrl.u32 %v1466, 7
    %v1468 = vsub.s32 4, %v1467
    %v1469 = vrot.slane %v91, %v1468
    %v1470 = vmul.f32 %v1465, %v1469
    %v1471 = vpack.c.bf16 %v1470, %v1470
    %s1472 = scalar_lea.vmem [#allocation6], 32
    %v1473 = vld [vmem:[%s1472] sm:$0xf]
    %v1474 = vld [vmem:[%s1472 + $0x4] sm:$0xf]
    %v1475 = vld [vmem:[%s1472 + $0x8] sm:$0xf]
    %v1476 = vld [vmem:[%s1472 + $0xc] sm:$0xf]
    %v1481 = vunpack.c.l.b16 %v1473
    %v1482 = vunpack.c.l.b16 %v1474
    %v1483 = vunpack.c.l.b16 %v1475
    %v1484 = vunpack.c.l.b16 %v1476
    %v1485 = vpack.c.b16 %v1482, %v1481
    %v1486 = vpack.c.b16 %v1484, %v1483
    %v1490 = vsel %vm109, %v1471, 0
    %1492 = vmatprep.subr.bf16.mxu0 0
    %1493 = vmatpush1.bf16.msra.mxu0 0
    %1494 = vmatprep.subr.bf16.mxu0 0
    %1495 = vmatpush1.bf16.msra.mxu0 0
    %1496 = vmatprep.subr.bf16.mxu0 0
    %1497 = vmatpush1.bf16.msra.mxu0 0
    %1498 = vmatprep.subr.bf16.mxu0 0
    %1499 = vmatpush1.bf16.msra.mxu0 0
    %1500 = vmatprep.subr.bf16.mxu0 0
    %1501 = vmatpush1.bf16.msra.mxu0 0
    %1502 = vmatprep.subr.bf16.mxu0 0
    %1503 = vmatpush1.bf16.msra.mxu0 0
    %1504 = vmatprep.subr.bf16.mxu0 0
    %1505 = vmatpush1.bf16.msra.mxu0 %v1486
    %1506 = vmatprep.subr.bf16.mxu0 0
    %1507 = vmatpush1.bf16.msra.mxu0 %v1485
    %1508 = vmatprep.subr.bf16.mxu0 0
    %1509 = vmatpush2.bf16.msra.mxu0 0
    %1510 = vmatprep.subr.bf16.mxu0 0
    %1511 = vmatpush2.bf16.msra.mxu0 0
    %1512 = vmatprep.subr.bf16.mxu0 0
    %1513 = vmatpush2.bf16.msra.mxu0 0
    %1514 = vmatprep.subr.bf16.mxu0 0
    %1515 = vmatpush2.bf16.msra.mxu0 0
    %1516 = vmatprep.subr.bf16.mxu0 0
    %1517 = vmatpush2.bf16.msra.mxu0 0
    %1518 = vmatprep.subr.bf16.mxu0 0
    %1519 = vmatpush2.bf16.msra.mxu0 0
    %1520 = vmatprep.subr.bf16.mxu0 0
    %1521 = vmatpush2.bf16.msra.mxu0 0
    %1522 = vmatprep.subr.bf16.mxu0 0
    %1523 = vmatpush2.bf16.msra.mxu0 0
    %1524 = vmatprep.mubr.bf16.mxu0 0
    %1525 = vmatmul.mubr.bf16.gmra.mxu0 %v1490
    %v1526 = vpop.f32.mrf.mxu0
    %v1527 = vadd.f32 0.0, %v1526
    %v1528 = vpop.f32.mrf.mxu0
    %v1529 = vpop.f32.mrf.mxu0
    %v1530 = vpop.f32.mrf.mxu0
    %1531 = vdwg.mxu0
    %v1532 = vmax.f32 %v1527, 0.0
    %v1533 = vpack.c.bf16 %v1532, %v1532
    %s1534 = scalar_lea.vmem [#allocation7], 32
    %v1535 = vld [vmem:[%s1534] sm:$0xf]
    %v1536 = vld [vmem:[%s1534 + $0x4] sm:$0xf]
    %v1537 = vld [vmem:[%s1534 + $0x8] sm:$0xf]
    %v1538 = vld [vmem:[%s1534 + $0xc] sm:$0xf]
    %v1543 = vunpack.c.l.b16 %v1535
    %v1544 = vunpack.c.l.b16 %v1536
    %v1545 = vunpack.c.l.b16 %v1537
    %v1546 = vunpack.c.l.b16 %v1538
    %v1547 = vpack.c.b16 %v1544, %v1543
    %v1548 = vpack.c.b16 %v1546, %v1545
    %v1552 = vsel %vm109, %v1533, 0
    %1554 = vmatprep.subr.bf16.mxu0 0
    %1555 = vmatpush1.bf16.msra.mxu0 0
    %1556 = vmatprep.subr.bf16.mxu0 0
    %1557 = vmatpush1.bf16.msra.mxu0 0
    %1558 = vmatprep.subr.bf16.mxu0 0
    %1559 = vmatpush1.bf16.msra.mxu0 0
    %1560 = vmatprep.subr.bf16.mxu0 0
    %1561 = vmatpush1.bf16.msra.mxu0 0
    %1562 = vmatprep.subr.bf16.mxu0 0
    %1563 = vmatpush1.bf16.msra.mxu0 0
    %1564 = vmatprep.subr.bf16.mxu0 0
    %1565 = vmatpush1.bf16.msra.mxu0 0
    %1566 = vmatprep.subr.bf16.mxu0 0
    %1567 = vmatpush1.bf16.msra.mxu0 %v1548
    %1568 = vmatprep.subr.bf16.mxu0 0
    %1569 = vmatpush1.bf16.msra.mxu0 %v1547
    %1570 = vmatprep.subr.bf16.mxu0 0
    %1571 = vmatpush2.bf16.msra.mxu0 0
    %1572 = vmatprep.subr.bf16.mxu0 0
    %1573 = vmatpush2.bf16.msra.mxu0 0
    %1574 = vmatprep.subr.bf16.mxu0 0
    %1575 = vmatpush2.bf16.msra.mxu0 0
    %1576 = vmatprep.subr.bf16.mxu0 0
    %1577 = vmatpush2.bf16.msra.mxu0 0
    %1578 = vmatprep.subr.bf16.mxu0 0
    %1579 = vmatpush2.bf16.msra.mxu0 0
    %1580 = vmatprep.subr.bf16.mxu0 0
    %1581 = vmatpush2.bf16.msra.mxu0 0
    %1582 = vmatprep.subr.bf16.mxu0 0
    %1583 = vmatpush2.bf16.msra.mxu0 0
    %1584 = vmatprep.subr.bf16.mxu0 0
    %1585 = vmatpush2.bf16.msra.mxu0 0
    %1586 = vmatprep.mubr.bf16.mxu0 0
    %1587 = vmatmul.mubr.bf16.gmra.mxu0 %v1552
    %v1588 = vpop.f32.mrf.mxu0
    %v1589 = vadd.f32 0.0, %v1588
    %v1590 = vpop.f32.mrf.mxu0
    %v1591 = vpop.f32.mrf.mxu0
    %v1592 = vpop.f32.mrf.mxu0
    %1593 = vdwg.mxu0
    %v1594 = vadd.f32 %v1470, %v1589
    %v1595 = vsel %vm109, %v1594, 0.0
    %1596 = vadd.xlane.f32.xlu0 %v1595
    %v1597 = vpop.xlane.xlu0 %1596
    %v1598 = vmul.f32 %v1594, %v1594
    %v1599 = vsel %vm109, %v1598, 0.0
    %1600 = vadd.xlane.f32.xlu0 %v1599
    %v1601 = vpop.xlane.xlu0 %1600
    %v1602 = vmul.f32 %v1597, 0.03125
    %v1603 = vmul.f32 %v1601, 0.03125
    %v1604 = vmul.f32 %v1602, %v1602
    %v1605 = vsub.f32 %v1603, %v1604
    %v1606 = vsub.f32 %v1594, %v1602
    %v1607 = vadd.f32 %v1605, 1e-05
    %v1608 = vrsqrt.pop %v1607
    %v1609 = vmul.f32 %v1606, %v1608
    %v1610 = vlaneseq
    %v1611 = vshrl.u32 %v1610, 7
    %v1612 = vsub.s32 5, %v1611
    %v1613 = vrot.slane %v91, %v1612
    %v1614 = vmul.f32 %v1609, %v1613
    %1615 = vst.msk [vmem:[%s6] sm:$0xff] %vm109, %v1106
    %s1616 = scalar_lea.vmem %s6, 8
    %1617 = vst.msk [vmem:[%s1616] sm:$0xff] %vm109, %v1614
    // Predicated region
    $region46: #{predictive_block_forward.1} parent=1 // pred_check
      _
    $region47: #{predictive_block_forward.1} parent=1 // pred_check_branch
      %1619 = sbr.rel (0) target = $region49
    $region48: #{predictive_block_forward.1} parent=1 // pred_region
      _
    $region49: #{predictive_block_forward.1} parent=1 // pred_fallthru
      _
    // Predicated region
    $region50: #{predictive_block_forward.1} parent=1 // pred_check
      _
    $region51: #{predictive_block_forward.1} parent=1 // pred_check_branch
      %1621 = sbr.rel (0) target = $region53
    $region52: #{predictive_block_forward.1} parent=1 // pred_region
      _
    $region53: #{predictive_block_forward.1} parent=1 // pred_fallthru
      _
    %1622 = vsyncpa [#allocation3], 1
    %1623 = vsyncpa [#allocation5], 1
    %1624 = vsyncpa [#allocation8], 1

</llo_original>
